<compile_context>
chip_gen: v5e
topology: v5e:2x2
jax: 0.10.0
libtpu: 0.0.40
codegen_flags: <defaults>
</compile_context>

<pallas_src>
import functools

import jax
import jax.numpy as jnp
from jax.experimental import pallas as pl
from jax.experimental.pallas import tpu as pltpu

H = W = 28
HW = H * W
C1, C2, C_OUT = 3, 5, 10
OUT_PAD = 128  # lane-dense padded output width (real outputs are the first 10)


def simple_model_kernel(w1_ref, b1_ref, w2_ref, b2_ref, x_ref, wl_ref, o_ref,
                        *, cdt):
    # One batch tile, pixels on the lane axis; drop to the compute dtype once.
    x = x_ref[...].astype(cdt)                                   # (TB, HW)

    # Tiny conv params: SMEM scalars, cast once to the compute dtype.
    w1 = [w1_ref[c].astype(cdt) for c in range(C1)]
    b1 = [b1_ref[c].astype(cdt) for c in range(C1)]
    w2 = [w2_ref[i].astype(cdt) for i in range(C2 * C1)]
    b2 = [b2_ref[o].astype(cdt) for o in range(C2)]

    # conv1: 1x1 conv with cin=1 -> per-channel scalar FMA + ReLU (VPU).
    y1 = [jnp.maximum(x * w1[c] + b1[c], 0.0) for c in range(C1)]

    # conv2 fused with the linear layer: for each output channel o, build
    # y2_o (VPU broadcast FMAs + ReLU) and immediately accumulate its
    # (TB, 784) @ (784, 128) contribution on the MXU (bf16 in, f32 acc).
    #   out[n, j] = sum_o sum_p y2_o[n, p] * wl[o, p, j]
    acc = jnp.zeros(o_ref.shape, jnp.float32)                    # (TB, 128)
    for o in range(C2):
        y2 = y1[0] * w2[o * C1 + 0]
        for c in range(1, C1):
            y2 = y2 + y1[c] * w2[o * C1 + c]
        y2 = jnp.maximum(y2 + b2[o], 0.0)                        # (TB, HW)
        acc = acc + jnp.dot(y2.astype(jnp.bfloat16), wl_ref[o],
                            preferred_element_type=jnp.float32)

    o_ref[...] = jnp.maximum(acc, 0.0)


def simple_model_forward(x_nchw, w1, b1, w2, b2, wl, *, tb=512):
    """x_nchw: (N, 1, 28, 28) f32; conv/linear weights in PyTorch shapes."""
    N = x_nchw.shape[0]
    x_flat = x_nchw.reshape(N, HW).astype(jnp.float32)           # (N, 784)

    # Elementwise-chain dtype: bf16 on chips with a bf16 VPU (v6e / v7x),
    # f32 on v5e and older (no bf16 VALU -> casts would add work, not remove).
    kind = jax.devices()[0].device_kind.lower()
    cdt = jnp.bfloat16 if ("v6" in kind or "v7" in kind) else jnp.float32

    # Batch tile: up to `tb` rows per grid step; sublane-align tiny batches.
    n_pad8 = ((N + 7) // 8) * 8
    TB = min(tb, n_pad8)
    n_pad = ((N + TB - 1) // TB) * TB
    # Only pad when the batch is actually ragged (avoids a full HBM copy of x).
    x_p = x_flat if n_pad == N else jnp.pad(x_flat, ((0, n_pad - N), (0, 0)))

    # Tiny conv params -> flat f32 vectors for SMEM scalar reads.
    w1k = w1.reshape(C1).astype(jnp.float32)                     # (3,)
    b1k = b1.reshape(C1).astype(jnp.float32)                     # (3,)
    w2k = w2.reshape(C2 * C1).astype(jnp.float32)                # (15,) [o*3+c]
    b2k = b2.reshape(C2).astype(jnp.float32)                     # (5,)

    # Linear weight: (10, 5*784) -> (5, 784, 10) to match PyTorch's
    # channel-major flatten, zero-pad the output dim to 128, cast bf16.
    wlk = wl.reshape(C_OUT, C2, HW).transpose(1, 2, 0)           # (5, 784, 10)
    wlk = jnp.pad(wlk, ((0, 0), (0, 0), (0, OUT_PAD - C_OUT)))
    wlk = wlk.astype(jnp.bfloat16)                               # (5, 784, 128)

    # Advisory cost: dominated by the 5 per-channel MXU dots + input traffic.
    flops = 2 * n_pad * HW * OUT_PAD * C2 + n_pad * HW * (2 * C1 + 2 * C1 * C2 + C2)
    bytes_accessed = (n_pad * HW * 4 + n_pad * OUT_PAD * 4
                      + C2 * HW * OUT_PAD * 2)
    cost = pl.CostEstimate(flops=flops, transcendentals=0,
                           bytes_accessed=bytes_accessed)

    smem_spec = pl.BlockSpec(memory_space=pltpu.MemorySpace.SMEM)
    kernel = functools.partial(simple_model_kernel, cdt=cdt)

    out = pl.pallas_call(
        kernel,
        out_shape=jax.ShapeDtypeStruct((n_pad, OUT_PAD), jnp.float32),
        grid=(n_pad // TB,),
        in_specs=[
            smem_spec,                                            # conv1 w
            smem_spec,                                            # conv1 b
            smem_spec,                                            # conv2 w
            smem_spec,                                            # conv2 b
            pl.BlockSpec((TB, HW), lambda n: (n, 0)),             # x tile
            pl.BlockSpec((C2, HW, OUT_PAD), lambda n: (0, 0, 0)),  # linear w
        ],
        out_specs=pl.BlockSpec((TB, OUT_PAD), lambda n: (n, 0)),
        compiler_params=pltpu.CompilerParams(
            dimension_semantics=("parallel",)),
        cost_estimate=cost,
    )(w1k, b1k, w2k, b2k, x_p, wlk)

    return out[:N, :C_OUT]


if __name__ == "__main__":
    key = jax.random.PRNGKey(0)
    ks = jax.random.split(key, 6)
    N = 2

    # Deterministic synthetic parameters (PyTorch shapes).
    x = jax.random.normal(ks[0], (N, 1, H, W), jnp.float32)            # NCHW
    w1 = jax.random.normal(ks[1], (C1, 1, 1, 1), jnp.float32) * 0.5    # conv1.weight
    b1 = jax.random.normal(ks[2], (C1,), jnp.float32) * 0.1            # conv1.bias
    w2 = jax.random.normal(ks[3], (C2, C1, 1, 1), jnp.float32) * 0.5   # conv2.weight
    b2 = jax.random.normal(ks[4], (C2,), jnp.float32) * 0.1            # conv2.bias
    wl = jax.random.normal(ks[5], (C_OUT, C2 * HW), jnp.float32) * 0.02  # linear.weight

    out = simple_model_forward(x, w1, b1, w2, b2, wl)
    out = jax.block_until_ready(out)

    # Pure-JAX (f32) reference of the PyTorch forward pass.
    y1 = jnp.maximum(
        jnp.einsum('nchw,oc->nohw', x, w1[:, :, 0, 0])
        + b1[None, :, None, None], 0.0)
    y2 = jnp.maximum(
        jnp.einsum('nchw,oc->nohw', y1, w2[:, :, 0, 0])
        + b2[None, :, None, None], 0.0)
    ref = jnp.maximum(y2.reshape(N, -1) @ wl.T, 0.0)

    assert out.shape == (N, C_OUT)
    # Tolerance covers bf16 MXU operands and (on v6e/v7x) the bf16 VPU chain.
    assert jnp.allclose(out, ref, atol=3e-2, rtol=3e-2), "mismatch vs reference"
    print("KERNEL_OK")
</pallas_src>

<mosaic_0001>
module attributes {stable_mosaic.version = 11 : i64} {
  func.func @simple_model_kernel(%arg0: i32, %arg1: memref<3xf32, #tpu.memory_space<smem>>, %arg2: memref<3xf32, #tpu.memory_space<smem>>, %arg3: memref<15xf32, #tpu.memory_space<smem>>, %arg4: memref<5xf32, #tpu.memory_space<smem>>, %arg5: memref<8x784xf32, #tpu.memory_space<vmem>>, %arg6: memref<5x784x128xbf16, #tpu.memory_space<vmem>>, %arg7: memref<8x128xf32, #tpu.memory_space<vmem>>) attributes {dimension_semantics = [#tpu.dimension_semantics<parallel>], iteration_bounds = array<i64: 1>, scalar_prefetch = 0 : i64, scratch_operands = 0 : i64, tpu.core_type = #tpu.core_type<tc>, window_params = [{transform_indices = @transform_0, window_bounds = array<i64: 3>}, {transform_indices = @transform_1, window_bounds = array<i64: 3>}, {transform_indices = @transform_2, window_bounds = array<i64: 15>}, {transform_indices = @transform_3, window_bounds = array<i64: 5>}, {transform_indices = @transform_4, window_bounds = array<i64: 8, 784>}, {pipeline_mode = #tpu.pipeline_mode<synchronous>, transform_indices = @transform_5, window_bounds = array<i64: 5, 784, 128>}, {transform_indices = @transform_6, window_bounds = array<i64: 8, 128>}]} {
    %c0 = arith.constant 0 : index
    %c0_0 = arith.constant 0 : index
    %0 = vector.load %arg5[%c0, %c0_0] : memref<8x784xf32, #tpu.memory_space<vmem>>, vector<8x784xf32>
    %c0_1 = arith.constant 0 : index
    %1 = memref.load %arg1[%c0_1] : memref<3xf32, #tpu.memory_space<smem>>
    %c1 = arith.constant 1 : index
    %2 = memref.load %arg1[%c1] : memref<3xf32, #tpu.memory_space<smem>>
    %c2 = arith.constant 2 : index
    %3 = memref.load %arg1[%c2] : memref<3xf32, #tpu.memory_space<smem>>
    %c0_2 = arith.constant 0 : index
    %4 = memref.load %arg2[%c0_2] : memref<3xf32, #tpu.memory_space<smem>>
    %c1_3 = arith.constant 1 : index
    %5 = memref.load %arg2[%c1_3] : memref<3xf32, #tpu.memory_space<smem>>
    %c2_4 = arith.constant 2 : index
    %6 = memref.load %arg2[%c2_4] : memref<3xf32, #tpu.memory_space<smem>>
    %c0_5 = arith.constant 0 : index
    %7 = memref.load %arg3[%c0_5] : memref<15xf32, #tpu.memory_space<smem>>
    %c1_6 = arith.constant 1 : index
    %8 = memref.load %arg3[%c1_6] : memref<15xf32, #tpu.memory_space<smem>>
    %c2_7 = arith.constant 2 : index
    %9 = memref.load %arg3[%c2_7] : memref<15xf32, #tpu.memory_space<smem>>
    %c3 = arith.constant 3 : index
    %10 = memref.load %arg3[%c3] : memref<15xf32, #tpu.memory_space<smem>>
    %c4 = arith.constant 4 : index
    %11 = memref.load %arg3[%c4] : memref<15xf32, #tpu.memory_space<smem>>
    %c5 = arith.constant 5 : index
    %12 = memref.load %arg3[%c5] : memref<15xf32, #tpu.memory_space<smem>>
    %c6 = arith.constant 6 : index
    %13 = memref.load %arg3[%c6] : memref<15xf32, #tpu.memory_space<smem>>
    %c7 = arith.constant 7 : index
    %14 = memref.load %arg3[%c7] : memref<15xf32, #tpu.memory_space<smem>>
    %c8 = arith.constant 8 : index
    %15 = memref.load %arg3[%c8] : memref<15xf32, #tpu.memory_space<smem>>
    %c9 = arith.constant 9 : index
    %16 = memref.load %arg3[%c9] : memref<15xf32, #tpu.memory_space<smem>>
    %c10 = arith.constant 10 : index
    %17 = memref.load %arg3[%c10] : memref<15xf32, #tpu.memory_space<smem>>
    %c11 = arith.constant 11 : index
    %18 = memref.load %arg3[%c11] : memref<15xf32, #tpu.memory_space<smem>>
    %c12 = arith.constant 12 : index
    %19 = memref.load %arg3[%c12] : memref<15xf32, #tpu.memory_space<smem>>
    %c13 = arith.constant 13 : index
    %20 = memref.load %arg3[%c13] : memref<15xf32, #tpu.memory_space<smem>>
    %c14 = arith.constant 14 : index
    %21 = memref.load %arg3[%c14] : memref<15xf32, #tpu.memory_space<smem>>
    %c0_8 = arith.constant 0 : index
    %22 = memref.load %arg4[%c0_8] : memref<5xf32, #tpu.memory_space<smem>>
    %c1_9 = arith.constant 1 : index
    %23 = memref.load %arg4[%c1_9] : memref<5xf32, #tpu.memory_space<smem>>
    %c2_10 = arith.constant 2 : index
    %24 = memref.load %arg4[%c2_10] : memref<5xf32, #tpu.memory_space<smem>>
    %c3_11 = arith.constant 3 : index
    %25 = memref.load %arg4[%c3_11] : memref<5xf32, #tpu.memory_space<smem>>
    %c4_12 = arith.constant 4 : index
    %26 = memref.load %arg4[%c4_12] : memref<5xf32, #tpu.memory_space<smem>>
    %27 = vector.broadcast %1 : f32 to vector<8x784xf32>
    %28 = arith.mulf %0, %27 : vector<8x784xf32>
    %29 = vector.broadcast %4 : f32 to vector<8x784xf32>
    %30 = arith.addf %28, %29 : vector<8x784xf32>
    %cst = arith.constant 0.000000e+00 : f32
    %31 = vector.broadcast %cst : f32 to vector<8x784xf32>
    %32 = arith.maximumf %30, %31 : vector<8x784xf32>
    %33 = vector.broadcast %2 : f32 to vector<8x784xf32>
    %34 = arith.mulf %0, %33 : vector<8x784xf32>
    %35 = vector.broadcast %5 : f32 to vector<8x784xf32>
    %36 = arith.addf %34, %35 : vector<8x784xf32>
    %cst_13 = arith.constant 0.000000e+00 : f32
    %37 = vector.broadcast %cst_13 : f32 to vector<8x784xf32>
    %38 = arith.maximumf %36, %37 : vector<8x784xf32>
    %39 = vector.broadcast %3 : f32 to vector<8x784xf32>
    %40 = arith.mulf %0, %39 : vector<8x784xf32>
    %41 = vector.broadcast %6 : f32 to vector<8x784xf32>
    %42 = arith.addf %40, %41 : vector<8x784xf32>
    %cst_14 = arith.constant 0.000000e+00 : f32
    %43 = vector.broadcast %cst_14 : f32 to vector<8x784xf32>
    %44 = arith.maximumf %42, %43 : vector<8x784xf32>
    %cst_15 = arith.constant 0.000000e+00 : f32
    %45 = vector.broadcast %cst_15 : f32 to vector<8x128xf32>
    %46 = vector.broadcast %7 : f32 to vector<8x784xf32>
    %47 = arith.mulf %32, %46 : vector<8x784xf32>
    %48 = vector.broadcast %8 : f32 to vector<8x784xf32>
    %49 = arith.mulf %38, %48 : vector<8x784xf32>
    %50 = arith.addf %47, %49 : vector<8x784xf32>
    %51 = vector.broadcast %9 : f32 to vector<8x784xf32>
    %52 = arith.mulf %44, %51 : vector<8x784xf32>
    %53 = arith.addf %50, %52 : vector<8x784xf32>
    %54 = vector.broadcast %22 : f32 to vector<8x784xf32>
    %55 = arith.addf %53, %54 : vector<8x784xf32>
    %cst_16 = arith.constant 0.000000e+00 : f32
    %56 = vector.broadcast %cst_16 : f32 to vector<8x784xf32>
    %57 = arith.maximumf %55, %56 : vector<8x784xf32>
    %58 = arith.truncf %57 : vector<8x784xf32> to vector<8x784xbf16>
    %c0_17 = arith.constant 0 : index
    %c0_18 = arith.constant 0 : index
    %c0_19 = arith.constant 0 : index
    %59 = vector.load %arg6[%c0_17, %c0_18, %c0_19] : memref<5x784x128xbf16, #tpu.memory_space<vmem>>, vector<1x784x128xbf16>
    %60 = vector.shape_cast %59 : vector<1x784x128xbf16> to vector<784x128xbf16>
    %cst_20 = arith.constant dense<0.000000e+00> : vector<8x128xf32>
    %61 = tpu.matmul %58, %60, %cst_20 {dimension_numbers = #tpu.dot_dimension_numbers<[1], [0], [0], [1], [0, 0, 1, 1], [], []>} : vector<8x784xbf16>, vector<784x128xbf16>, vector<8x128xf32> -> vector<8x128xf32>
    %62 = arith.addf %45, %61 : vector<8x128xf32>
    %63 = vector.broadcast %10 : f32 to vector<8x784xf32>
    %64 = arith.mulf %32, %63 : vector<8x784xf32>
    %65 = vector.broadcast %11 : f32 to vector<8x784xf32>
    %66 = arith.mulf %38, %65 : vector<8x784xf32>
    %67 = arith.addf %64, %66 : vector<8x784xf32>
    %68 = vector.broadcast %12 : f32 to vector<8x784xf32>
    %69 = arith.mulf %44, %68 : vector<8x784xf32>
    %70 = arith.addf %67, %69 : vector<8x784xf32>
    %71 = vector.broadcast %23 : f32 to vector<8x784xf32>
    %72 = arith.addf %70, %71 : vector<8x784xf32>
    %cst_21 = arith.constant 0.000000e+00 : f32
    %73 = vector.broadcast %cst_21 : f32 to vector<8x784xf32>
    %74 = arith.maximumf %72, %73 : vector<8x784xf32>
    %75 = arith.truncf %74 : vector<8x784xf32> to vector<8x784xbf16>
    %c1_22 = arith.constant 1 : index
    %c0_23 = arith.constant 0 : index
    %c0_24 = arith.constant 0 : index
    %76 = vector.load %arg6[%c1_22, %c0_23, %c0_24] : memref<5x784x128xbf16, #tpu.memory_space<vmem>>, vector<1x784x128xbf16>
    %77 = vector.shape_cast %76 : vector<1x784x128xbf16> to vector<784x128xbf16>
    %cst_25 = arith.constant dense<0.000000e+00> : vector<8x128xf32>
    %78 = tpu.matmul %75, %77, %cst_25 {dimension_numbers = #tpu.dot_dimension_numbers<[1], [0], [0], [1], [0, 0, 1, 1], [], []>} : vector<8x784xbf16>, vector<784x128xbf16>, vector<8x128xf32> -> vector<8x128xf32>
    %79 = arith.addf %62, %78 : vector<8x128xf32>
    %80 = vector.broadcast %13 : f32 to vector<8x784xf32>
    %81 = arith.mulf %32, %80 : vector<8x784xf32>
    %82 = vector.broadcast %14 : f32 to vector<8x784xf32>
    %83 = arith.mulf %38, %82 : vector<8x784xf32>
    %84 = arith.addf %81, %83 : vector<8x784xf32>
    %85 = vector.broadcast %15 : f32 to vector<8x784xf32>
    %86 = arith.mulf %44, %85 : vector<8x784xf32>
    %87 = arith.addf %84, %86 : vector<8x784xf32>
    %88 = vector.broadcast %24 : f32 to vector<8x784xf32>
    %89 = arith.addf %87, %88 : vector<8x784xf32>
    %cst_26 = arith.constant 0.000000e+00 : f32
    %90 = vector.broadcast %cst_26 : f32 to vector<8x784xf32>
    %91 = arith.maximumf %89, %90 : vector<8x784xf32>
    %92 = arith.truncf %91 : vector<8x784xf32> to vector<8x784xbf16>
    %c2_27 = arith.constant 2 : index
    %c0_28 = arith.constant 0 : index
    %c0_29 = arith.constant 0 : index
    %93 = vector.load %arg6[%c2_27, %c0_28, %c0_29] : memref<5x784x128xbf16, #tpu.memory_space<vmem>>, vector<1x784x128xbf16>
    %94 = vector.shape_cast %93 : vector<1x784x128xbf16> to vector<784x128xbf16>
    %cst_30 = arith.constant dense<0.000000e+00> : vector<8x128xf32>
    %95 = tpu.matmul %92, %94, %cst_30 {dimension_numbers = #tpu.dot_dimension_numbers<[1], [0], [0], [1], [0, 0, 1, 1], [], []>} : vector<8x784xbf16>, vector<784x128xbf16>, vector<8x128xf32> -> vector<8x128xf32>
    %96 = arith.addf %79, %95 : vector<8x128xf32>
    %97 = vector.broadcast %16 : f32 to vector<8x784xf32>
    %98 = arith.mulf %32, %97 : vector<8x784xf32>
    %99 = vector.broadcast %17 : f32 to vector<8x784xf32>
    %100 = arith.mulf %38, %99 : vector<8x784xf32>
    %101 = arith.addf %98, %100 : vector<8x784xf32>
    %102 = vector.broadcast %18 : f32 to vector<8x784xf32>
    %103 = arith.mulf %44, %102 : vector<8x784xf32>
    %104 = arith.addf %101, %103 : vector<8x784xf32>
    %105 = vector.broadcast %25 : f32 to vector<8x784xf32>
    %106 = arith.addf %104, %105 : vector<8x784xf32>
    %cst_31 = arith.constant 0.000000e+00 : f32
    %107 = vector.broadcast %cst_31 : f32 to vector<8x784xf32>
    %108 = arith.maximumf %106, %107 : vector<8x784xf32>
    %109 = arith.truncf %108 : vector<8x784xf32> to vector<8x784xbf16>
    %c3_32 = arith.constant 3 : index
    %c0_33 = arith.constant 0 : index
    %c0_34 = arith.constant 0 : index
    %110 = vector.load %arg6[%c3_32, %c0_33, %c0_34] : memref<5x784x128xbf16, #tpu.memory_space<vmem>>, vector<1x784x128xbf16>
    %111 = vector.shape_cast %110 : vector<1x784x128xbf16> to vector<784x128xbf16>
    %cst_35 = arith.constant dense<0.000000e+00> : vector<8x128xf32>
    %112 = tpu.matmul %109, %111, %cst_35 {dimension_numbers = #tpu.dot_dimension_numbers<[1], [0], [0], [1], [0, 0, 1, 1], [], []>} : vector<8x784xbf16>, vector<784x128xbf16>, vector<8x128xf32> -> vector<8x128xf32>
    %113 = arith.addf %96, %112 : vector<8x128xf32>
    %114 = vector.broadcast %19 : f32 to vector<8x784xf32>
    %115 = arith.mulf %32, %114 : vector<8x784xf32>
    %116 = vector.broadcast %20 : f32 to vector<8x784xf32>
    %117 = arith.mulf %38, %116 : vector<8x784xf32>
    %118 = arith.addf %115, %117 : vector<8x784xf32>
    %119 = vector.broadcast %21 : f32 to vector<8x784xf32>
    %120 = arith.mulf %44, %119 : vector<8x784xf32>
    %121 = arith.addf %118, %120 : vector<8x784xf32>
    %122 = vector.broadcast %26 : f32 to vector<8x784xf32>
    %123 = arith.addf %121, %122 : vector<8x784xf32>
    %cst_36 = arith.constant 0.000000e+00 : f32
    %124 = vector.broadcast %cst_36 : f32 to vector<8x784xf32>
    %125 = arith.maximumf %123, %124 : vector<8x784xf32>
    %126 = arith.truncf %125 : vector<8x784xf32> to vector<8x784xbf16>
    %c4_37 = arith.constant 4 : index
    %c0_38 = arith.constant 0 : index
    %c0_39 = arith.constant 0 : index
    %127 = vector.load %arg6[%c4_37, %c0_38, %c0_39] : memref<5x784x128xbf16, #tpu.memory_space<vmem>>, vector<1x784x128xbf16>
    %128 = vector.shape_cast %127 : vector<1x784x128xbf16> to vector<784x128xbf16>
    %cst_40 = arith.constant dense<0.000000e+00> : vector<8x128xf32>
    %129 = tpu.matmul %126, %128, %cst_40 {dimension_numbers = #tpu.dot_dimension_numbers<[1], [0], [0], [1], [0, 0, 1, 1], [], []>} : vector<8x784xbf16>, vector<784x128xbf16>, vector<8x128xf32> -> vector<8x128xf32>
    %130 = arith.addf %113, %129 : vector<8x128xf32>
    %cst_41 = arith.constant 0.000000e+00 : f32
    %131 = vector.broadcast %cst_41 : f32 to vector<8x128xf32>
    %132 = arith.maximumf %130, %131 : vector<8x128xf32>
    %c0_42 = arith.constant 0 : index
    %c0_43 = arith.constant 0 : index
    %133 = vector.load %arg7[%c0_42, %c0_43] : memref<8x128xf32, #tpu.memory_space<vmem>>, vector<8x128xf32>
    tpu.vector_store %arg7[%c0_42, %c0_43], %132 {strides = array<i32>} : memref<8x128xf32, #tpu.memory_space<vmem>>, vector<8x128xf32>,
    return
  }
  func.func @transform_0(%arg0: i32) -> i32 {
    %c0_i32 = arith.constant 0 : i32
    %c0_i32_0 = arith.constant 0 : i32
    return %c0_i32 : i32
  }
  func.func @transform_1(%arg0: i32) -> i32 {
    %c0_i32 = arith.constant 0 : i32
    %c0_i32_0 = arith.constant 0 : i32
    return %c0_i32 : i32
  }
  func.func @transform_2(%arg0: i32) -> i32 {
    %c0_i32 = arith.constant 0 : i32
    %c0_i32_0 = arith.constant 0 : i32
    return %c0_i32 : i32
  }
  func.func @transform_3(%arg0: i32) -> i32 {
    %c0_i32 = arith.constant 0 : i32
    %c0_i32_0 = arith.constant 0 : i32
    return %c0_i32 : i32
  }
  func.func @transform_4(%arg0: i32) -> (i32, i32) {
    %c0_i32 = arith.constant 0 : i32
    %c0_i32_0 = arith.constant 0 : i32
    return %arg0, %c0_i32 : i32, i32
  }
  func.func @transform_5(%arg0: i32) -> (i32, i32, i32) {
    %c0_i32 = arith.constant 0 : i32
    %c0_i32_0 = arith.constant 0 : i32
    %c0_i32_1 = arith.constant 0 : i32
    %c0_i32_2 = arith.constant 0 : i32
    return %c0_i32, %c0_i32_0, %c0_i32_1 : i32, i32, i32
  }
  func.func @transform_6(%arg0: i32) -> (i32, i32) {
    %c0_i32 = arith.constant 0 : i32
    %c0_i32_0 = arith.constant 0 : i32
    return %arg0, %c0_i32 : i32, i32
  }
}

</mosaic_0001>

<llo_original>
// kernel: tpu_custom_call.1
$region0: #{tpu_custom_call.1}
  #allocation0 [shape = 'u32[]', space=smem, size = 0x4, offset = 0x4, fixed_abs, tag = 'smem constant byte address 0x4 - core index']
  #allocation1 [shape = 'u32[72,128]{1,0:T(1,128)}', space=vmem, size = 0x9000, scoped, tag = 'internal scratch']
  %s0 = inlined_call_operand.hbm [shape: f32[3], index: 0, kind: input, shape index: {}]
  %s1 = inlined_call_operand.hbm [shape: f32[3], index: 1, kind: input, shape index: {}]
  %s2 = inlined_call_operand.vmem [shape: f32[15], index: 2, kind: input, shape index: {}]
  %s3 = inlined_call_operand.vmem [shape: f32[5], index: 3, kind: input, shape index: {}]
  %s4 = inlined_call_operand.hbm [shape: f32[8,784], index: 4, kind: input, shape index: {}]
  %s5 = inlined_call_operand.hbm [shape: bf16[5,784,128], index: 5, kind: input, shape index: {}]
  %s6 = inlined_call_operand.hbm [shape: f32[8,128], index: 6, kind: output, shape index: {}]
  %s7 = sld [smem:[#allocation0]]
  $region58: #{tpu_custom_call.1} parent=0
    _
  %s9 = ssub.s32 1, %s7
  %s10 = scalar_select 0, %s9, %s7
  $region1: #{tpu_custom_call.1} parent=0
    #allocation2 [shape = 'u8[512]{0}', space=smem, size = 0x200, scoped, tag = 'input window, operand 0, single buffered']
    #allocation3 [shape = 's32[1]{0}', space=sflag, size = 0x4, scoped, tag = 'scoped memory for tpu_custom_call.1']
    #allocation4 [shape = 's32[1]{0}', space=sflag, size = 0x4, scoped, tag = 'scoped memory for tpu_custom_call.1']
    #allocation5 [shape = 's32[1]{0}', space=sflag, size = 0x4, scoped, tag = 'scoped memory for tpu_custom_call.1']
    #allocation6 [shape = 's32[1]{0}', space=sflag, size = 0x4, scoped, tag = 'scoped memory for tpu_custom_call.1']
    #allocation7 [shape = 'u8[512]{0}', space=smem, size = 0x200, scoped, tag = 'input window, operand 1, single buffered']
    #allocation8 [shape = 's32[1]{0}', space=sflag, size = 0x4, scoped, tag = 'scoped memory for tpu_custom_call.1']
    #allocation9 [shape = 'u8[512]{0}', space=smem, size = 0x200, scoped, tag = 'input window, operand 2, single buffered']
    #allocation10 [shape = 'u8[512]{0}', space=smem, size = 0x200, scoped, tag = 'input window, operand 3, single buffered']
    #allocation11 [shape = 's32[1]{0}', space=sflag, size = 0x4, scoped, tag = 'scoped memory for tpu_custom_call.1']
    #allocation12 [shape = 'u8[28672]{0}', space=vmem, size = 0x7000, scoped, tag = 'input window, operand 4, single buffered']
    #allocation13 [shape = 'u8[1003520]{0}', space=vmem, size = 0xf5000, scoped, tag = 'input window, operand 5, single buffered']
    #allocation14 [shape = 's32[1]{0}', space=sflag, size = 0x4, scoped, tag = 'scoped memory for tpu_custom_call.1']
    #allocation15 [shape = 'u8[4096]{0}', space=vmem, size = 0x1000, scoped, tag = 'output window, operand 0, single buffered']
    %11 = vsyncpa [#allocation5], 0
    %12 = vsyncpa [#allocation8], 0
    %13 = vsyncpa [#allocation6], 0
    %14 = vsyncpa [#allocation11], 0
    %15 = vsyncpa [#allocation3], 0
    %16 = vsyncpa [#allocation14], 0
    %17 = vsyncpa [#allocation4], 0
    // Predicated region
    $region2: #{tpu_custom_call.1} parent=1 // pred_check
      _
    $region3: #{tpu_custom_call.1} parent=1 // pred_check_branch
      %19 = sbr.rel (0) target = $region5
    $region4: #{tpu_custom_call.1} parent=1 // pred_region
      %21 = vsyncadd [#allocation5], 0
      %s23 = sshll.u32 %s0, 4
      %s24 = int_to_ptr.hbm [resolvable:$true] %s23
      %26 = dma.hbm_to_smem %s24, 16, [#allocation2], [#allocation5]
    $region5: #{tpu_custom_call.1} parent=1 // pred_fallthru
      _
    // Predicated region
    $region6: #{tpu_custom_call.1} parent=1 // pred_check
      _
    $region7: #{tpu_custom_call.1} parent=1 // pred_check_branch
      %28 = sbr.rel (0) target = $region9
    $region8: #{tpu_custom_call.1} parent=1 // pred_region
      %30 = vsyncadd [#allocation8], 0
      %s32 = sshll.u32 %s1, 4
      %s33 = int_to_ptr.hbm [resolvable:$true] %s32
      %35 = dma.hbm_to_smem %s33, 16, [#allocation7], [#allocation8]
    $region9: #{tpu_custom_call.1} parent=1 // pred_fallthru
      _
    // Predicated region
    $region10: #{tpu_custom_call.1} parent=1 // pred_check
      _
    $region11: #{tpu_custom_call.1} parent=1 // pred_check_branch
      %37 = sbr.rel (0) target = $region13
    $region12: #{tpu_custom_call.1} parent=1 // pred_region
      %39 = vsyncadd [#allocation6], 0
      %s41 = sshll.u32 %s2, 4
      %s42 = int_to_ptr.vmem [resolvable:$true] %s41
      %44 = dma.vmem_to_smem %s42, 16, [#allocation9], [#allocation6]
    $region13: #{tpu_custom_call.1} parent=1 // pred_fallthru
      _
    // Predicated region
    $region14: #{tpu_custom_call.1} parent=1 // pred_check
      _
    $region15: #{tpu_custom_call.1} parent=1 // pred_check_branch
      %46 = sbr.rel (0) target = $region17
    $region16: #{tpu_custom_call.1} parent=1 // pred_region
      %48 = vsyncadd [#allocation11], 0
      %s50 = sshll.u32 %s3, 4
      %s51 = int_to_ptr.vmem [resolvable:$true] %s50
      %53 = dma.vmem_to_smem %s51, 16, [#allocation10], [#allocation11]
    $region17: #{tpu_custom_call.1} parent=1 // pred_fallthru
      _
    // Predicated region
    $region18: #{tpu_custom_call.1} parent=1 // pred_check
      _
    $region19: #{tpu_custom_call.1} parent=1 // pred_check_branch
      %55 = sbr.rel (0) target = $region21
    $region20: #{tpu_custom_call.1} parent=1 // pred_region
      %57 = vsyncadd [#allocation3], 0
      %s59 = sshll.u32 %s4, 4
      %s60 = int_to_ptr.hbm [resolvable:$true] %s59
      %s61 = sshll.u32 [#allocation12], 4
      %s62 = int_to_ptr.vmem [resolvable:$true] %s61
      %64 = dma.hbm_to_vmem [thread:$0]  %s60, 896, %s62, [#allocation3]
    $region21: #{tpu_custom_call.1} parent=1 // pred_fallthru
      _
    // Predicated region
    $region22: #{tpu_custom_call.1} parent=1 // pred_check
      _
    $region23: #{tpu_custom_call.1} parent=1 // pred_check_branch
      %66 = sbr.rel (0) target = $region25
    $region24: #{tpu_custom_call.1} parent=1 // pred_region
      %68 = vsyncadd [#allocation14], 0
      %s69 = sshll.u32 %s5, 4
      %s70 = int_to_ptr.hbm [resolvable:$true] %s69
      %s71 = sshll.u32 [#allocation13], 4
      %s72 = int_to_ptr.vmem [resolvable:$true] %s71
      %77 = dma.hbm_to_vmem [thread:$0]  %s70, 31360, %s72, [#allocation14], 64, 64, 4
    $region25: #{tpu_custom_call.1} parent=1 // pred_fallthru
      _
    // Predicated region
    $region26: #{tpu_custom_call.1} parent=1 // pred_check
      _
    $region27: #{tpu_custom_call.1} parent=1 // pred_check_branch
      %79 = sbr.rel (0) target = $region29
    $region28: #{tpu_custom_call.1} parent=1 // pred_region
      %81 = dma.done [#allocation5], 16
    $region29: #{tpu_custom_call.1} parent=1 // pred_fallthru
      _
    // Predicated region
    $region30: #{tpu_custom_call.1} parent=1 // pred_check
      _
    $region31: #{tpu_custom_call.1} parent=1 // pred_check_branch
      %83 = sbr.rel (0) target = $region33
    $region32: #{tpu_custom_call.1} parent=1 // pred_region
      %85 = dma.done [#allocation8], 16
    $region33: #{tpu_custom_call.1} parent=1 // pred_fallthru
      _
    // Predicated region
    $region34: #{tpu_custom_call.1} parent=1 // pred_check
      _
    $region35: #{tpu_custom_call.1} parent=1 // pred_check_branch
      %87 = sbr.rel (0) target = $region37
    $region36: #{tpu_custom_call.1} parent=1 // pred_region
      %89 = dma.done [#allocation6], 16
    $region37: #{tpu_custom_call.1} parent=1 // pred_fallthru
      _
    // Predicated region
    $region38: #{tpu_custom_call.1} parent=1 // pred_check
      _
    $region39: #{tpu_custom_call.1} parent=1 // pred_check_branch
      %91 = sbr.rel (0) target = $region41
    $region40: #{tpu_custom_call.1} parent=1 // pred_region
      %93 = dma.done [#allocation11], 16
    $region41: #{tpu_custom_call.1} parent=1 // pred_fallthru
      _
    // Predicated region
    $region42: #{tpu_custom_call.1} parent=1 // pred_check
      _
    $region43: #{tpu_custom_call.1} parent=1 // pred_check_branch
      %95 = sbr.rel (0) target = $region45
    $region44: #{tpu_custom_call.1} parent=1 // pred_region
      %97 = dma.done [#allocation3], 896
    $region45: #{tpu_custom_call.1} parent=1 // pred_fallthru
      _
    // Predicated region
    $region46: #{tpu_custom_call.1} parent=1 // pred_check
      _
    $region47: #{tpu_custom_call.1} parent=1 // pred_check_branch
      %99 = sbr.rel (0) target = $region49
    $region48: #{tpu_custom_call.1} parent=1 // pred_region
      %101 = dma.done [#allocation14], 31360
    $region49: #{tpu_custom_call.1} parent=1 // pred_fallthru
      _
    %102 = sfence
    %v104 = vld [vmem:[#allocation12] sm:$0xff]
    %v105 = vld [vmem:[#allocation12 + $0x8] sm:$0xff]
    %v106 = vld [vmem:[#allocation12 + $0x10] sm:$0xff]
    %v107 = vld [vmem:[#allocation12 + $0x18] sm:$0xff]
    %v108 = vld [vmem:[#allocation12 + $0x20] sm:$0xff]
    %v109 = vld [vmem:[#allocation12 + $0x28] sm:$0xff]
    %v110 = vld [vmem:[#allocation12 + $0x30] sm:$0xff]
    %s111 = sld [smem:[#allocation2]]
    %s112 = sld [smem:[#allocation2 + $0x1]]
    %s113 = sld [smem:[#allocation2 + $0x2]]
    %s114 = sld [smem:[#allocation7]]
    %s115 = sld [smem:[#allocation7 + $0x1]]
    %s116 = sld [smem:[#allocation7 + $0x2]]
    %s117 = sld [smem:[#allocation9]]
    %s118 = sld [smem:[#allocation9 + $0x1]]
    %s119 = sld [smem:[#allocation9 + $0x2]]
    %s120 = sld [smem:[#allocation9 + $0x3]]
    %s121 = sld [smem:[#allocation9 + $0x4]]
    %s122 = sld [smem:[#allocation9 + $0x5]]
    %s123 = sld [smem:[#allocation9 + $0x6]]
    %s124 = sld [smem:[#allocation9 + $0x7]]
    %s125 = sld [smem:[#allocation9 + $0x8]]
    %s126 = sld [smem:[#allocation9 + $0x9]]
    %s127 = sld [smem:[#allocation9 + $0xa]]
    %s128 = sld [smem:[#allocation9 + $0xb]]
    %s129 = sld [smem:[#allocation9 + $0xc]]
    %s130 = sld [smem:[#allocation9 + $0xd]]
    %s131 = sld [smem:[#allocation9 + $0xe]]
    %s132 = sld [smem:[#allocation10]]
    %s133 = sld [smem:[#allocation10 + $0x1]]
    %s134 = sld [smem:[#allocation10 + $0x2]]
    %s135 = sld [smem:[#allocation10 + $0x3]]
    %s136 = sld [smem:[#allocation10 + $0x4]]
    %v137 = vstv %s111
    %v138 = vmul.f32 %v104, %v137
    %v139 = vmul.f32 %v105, %v137
    %v140 = vmul.f32 %v106, %v137
    %v141 = vmul.f32 %v107, %v137
    %v142 = vmul.f32 %v108, %v137
    %v143 = vmul.f32 %v109, %v137
    %v144 = vmul.f32 %v110, %v137
    %v145 = vstv %s114
    %v146 = vadd.f32 %v138, %v145
    %v147 = vadd.f32 %v139, %v145
    %v148 = vadd.f32 %v140, %v145
    %v149 = vadd.f32 %v141, %v145
    %v150 = vadd.f32 %v142, %v145
    %v151 = vadd.f32 %v143, %v145
    %v152 = vadd.f32 %v144, %v145
    %v153 = vmax.f32 %v146, 0.0
    %v154 = vmax.f32 %v147, 0.0
    %v155 = vmax.f32 %v148, 0.0
    %v156 = vmax.f32 %v149, 0.0
    %v157 = vmax.f32 %v150, 0.0
    %v158 = vmax.f32 %v151, 0.0
    %v159 = vmax.f32 %v152, 0.0
    %v160 = vstv %s112
    %v161 = vmul.f32 %v104, %v160
    %v162 = vmul.f32 %v105, %v160
    %v163 = vmul.f32 %v106, %v160
    %v164 = vmul.f32 %v107, %v160
    %v165 = vmul.f32 %v108, %v160
    %v166 = vmul.f32 %v109, %v160
    %v167 = vmul.f32 %v110, %v160
    %v168 = vstv %s115
    %v169 = vadd.f32 %v161, %v168
    %v170 = vadd.f32 %v162, %v168
    %v171 = vadd.f32 %v163, %v168
    %v172 = vadd.f32 %v164, %v168
    %v173 = vadd.f32 %v165, %v168
    %v174 = vadd.f32 %v166, %v168
    %v175 = vadd.f32 %v167, %v168
    %v176 = vmax.f32 %v169, 0.0
    %v177 = vmax.f32 %v170, 0.0
    %v178 = vmax.f32 %v171, 0.0
    %v179 = vmax.f32 %v172, 0.0
    %v180 = vmax.f32 %v173, 0.0
    %v181 = vmax.f32 %v174, 0.0
    %v182 = vmax.f32 %v175, 0.0
    %v183 = vstv %s113
    %v184 = vmul.f32 %v104, %v183
    %v185 = vmul.f32 %v105, %v183
    %v186 = vmul.f32 %v106, %v183
    %v187 = vmul.f32 %v107, %v183
    %v188 = vmul.f32 %v108, %v183
    %v189 = vmul.f32 %v109, %v183
    %v190 = vmul.f32 %v110, %v183
    %v191 = vstv %s116
    %v192 = vadd.f32 %v184, %v191
    %v193 = vadd.f32 %v185, %v191
    %v194 = vadd.f32 %v186, %v191
    %v195 = vadd.f32 %v187, %v191
    %v196 = vadd.f32 %v188, %v191
    %v197 = vadd.f32 %v189, %v191
    %v198 = vadd.f32 %v190, %v191
    %v199 = vmax.f32 %v192, 0.0
    %v200 = vmax.f32 %v193, 0.0
    %v201 = vmax.f32 %v194, 0.0
    %v202 = vmax.f32 %v195, 0.0
    %v203 = vmax.f32 %v196, 0.0
    %v204 = vmax.f32 %v197, 0.0
    %v205 = vmax.f32 %v198, 0.0
    %v206 = vstv %s117
    %v207 = vmul.f32 %v153, %v206
    %v208 = vmul.f32 %v154, %v206
    %v209 = vmul.f32 %v155, %v206
    %v210 = vmul.f32 %v156, %v206
    %v211 = vmul.f32 %v157, %v206
    %v212 = vmul.f32 %v158, %v206
    %v213 = vmul.f32 %v159, %v206
    %v214 = vstv %s118
    %v215 = vmul.f32 %v176, %v214
    %v216 = vmul.f32 %v177, %v214
    %v217 = vmul.f32 %v178, %v214
    %v218 = vmul.f32 %v179, %v214
    %v219 = vmul.f32 %v180, %v214
    %v220 = vmul.f32 %v181, %v214
    %v221 = vmul.f32 %v182, %v214
    %v222 = vadd.f32 %v207, %v215
    %v223 = vadd.f32 %v208, %v216
    %v224 = vadd.f32 %v209, %v217
    %v225 = vadd.f32 %v210, %v218
    %v226 = vadd.f32 %v211, %v219
    %v227 = vadd.f32 %v212, %v220
    %v228 = vadd.f32 %v213, %v221
    %v229 = vstv %s119
    %v230 = vmul.f32 %v199, %v229
    %v231 = vmul.f32 %v200, %v229
    %v232 = vmul.f32 %v201, %v229
    %v233 = vmul.f32 %v202, %v229
    %v234 = vmul.f32 %v203, %v229
    %v235 = vmul.f32 %v204, %v229
    %v236 = vmul.f32 %v205, %v229
    %v237 = vadd.f32 %v222, %v230
    %v238 = vadd.f32 %v223, %v231
    %v239 = vadd.f32 %v224, %v232
    %v240 = vadd.f32 %v225, %v233
    %v241 = vadd.f32 %v226, %v234
    %v242 = vadd.f32 %v227, %v235
    %v243 = vadd.f32 %v228, %v236
    %v244 = vstv %s132
    %v245 = vadd.f32 %v237, %v244
    %v246 = vadd.f32 %v238, %v244
    %v247 = vadd.f32 %v239, %v244
    %v248 = vadd.f32 %v240, %v244
    %v249 = vadd.f32 %v241, %v244
    %v250 = vadd.f32 %v242, %v244
    %v251 = vadd.f32 %v243, %v244
    %v252 = vmax.f32 %v245, 0.0
    %v253 = vmax.f32 %v246, 0.0
    %v254 = vmax.f32 %v247, 0.0
    %v255 = vmax.f32 %v248, 0.0
    %v256 = vmax.f32 %v249, 0.0
    %v257 = vmax.f32 %v250, 0.0
    %v258 = vmax.f32 %v251, 0.0
    %v259 = vpack.c.bf16 %v252, %v252
    %v260 = vpack.c.bf16 %v253, %v253
    %v261 = vpack.c.bf16 %v254, %v254
    %v262 = vpack.c.bf16 %v255, %v255
    %v263 = vpack.c.bf16 %v256, %v256
    %v264 = vpack.c.bf16 %v257, %v257
    %v265 = vpack.c.bf16 %v258, %v258
    %v266 = vld [vmem:[#allocation13] sm:$0xf]
    %v267 = vld [vmem:[#allocation13 + $0x4] sm:$0xf]
    %v268 = vld [vmem:[#allocation13 + $0x8] sm:$0xf]
    %v269 = vld [vmem:[#allocation13 + $0xc] sm:$0xf]
    %v270 = vld [vmem:[#allocation13 + $0x10] sm:$0xf]
    %v271 = vld [vmem:[#allocation13 + $0x14] sm:$0xf]
    %v272 = vld [vmem:[#allocation13 + $0x18] sm:$0xf]
    %v273 = vld [vmem:[#allocation13 + $0x1c] sm:$0xf]
    %v274 = vld [vmem:[#allocation13 + $0x20] sm:$0xf]
    %v275 = vld [vmem:[#allocation13 + $0x24] sm:$0xf]
    %v276 = vld [vmem:[#allocation13 + $0x28] sm:$0xf]
    %v277 = vld [vmem:[#allocation13 + $0x2c] sm:$0xf]
    %v278 = vld [vmem:[#allocation13 + $0x30] sm:$0xf]
    %v279 = vld [vmem:[#allocation13 + $0x34] sm:$0xf]
    %v280 = vld [vmem:[#allocation13 + $0x38] sm:$0xf]
    %v281 = vld [vmem:[#allocation13 + $0x3c] sm:$0xf]
    %v282 = vld [vmem:[#allocation13 + $0x40] sm:$0xf]
    %v283 = vld [vmem:[#allocation13 + $0x44] sm:$0xf]
    %v284 = vld [vmem:[#allocation13 + $0x48] sm:$0xf]
    %v285 = vld [vmem:[#allocation13 + $0x4c] sm:$0xf]
    %v286 = vld [vmem:[#allocation13 + $0x50] sm:$0xf]
    %v287 = vld [vmem:[#allocation13 + $0x54] sm:$0xf]
    %v288 = vld [vmem:[#allocation13 + $0x58] sm:$0xf]
    %v289 = vld [vmem:[#allocation13 + $0x5c] sm:$0xf]
    %v290 = vld [vmem:[#allocation13 + $0x60] sm:$0xf]
    %v291 = vld [vmem:[#allocation13 + $0x64] sm:$0xf]
    %v292 = vld [vmem:[#allocation13 + $0x68] sm:$0xf]
    %v293 = vld [vmem:[#allocation13 + $0x6c] sm:$0xf]
    %v294 = vld [vmem:[#allocation13 + $0x70] sm:$0xf]
    %v295 = vld [vmem:[#allocation13 + $0x74] sm:$0xf]
    %v296 = vld [vmem:[#allocation13 + $0x78] sm:$0xf]
    %v297 = vld [vmem:[#allocation13 + $0x7c] sm:$0xf]
    %v298 = vld [vmem:[#allocation13 + $0x80] sm:$0xf]
    %v299 = vld [vmem:[#allocation13 + $0x84] sm:$0xf]
    %v300 = vld [vmem:[#allocation13 + $0x88] sm:$0xf]
    %v301 = vld [vmem:[#allocation13 + $0x8c] sm:$0xf]
    %v302 = vld [vmem:[#allocation13 + $0x90] sm:$0xf]
    %v303 = vld [vmem:[#allocation13 + $0x94] sm:$0xf]
    %v304 = vld [vmem:[#allocation13 + $0x98] sm:$0xf]
    %v305 = vld [vmem:[#allocation13 + $0x9c] sm:$0xf]
    %v306 = vld [vmem:[#allocation13 + $0xa0] sm:$0xf]
    %v307 = vld [vmem:[#allocation13 + $0xa4] sm:$0xf]
    %v308 = vld [vmem:[#allocation13 + $0xa8] sm:$0xf]
    %v309 = vld [vmem:[#allocation13 + $0xac] sm:$0xf]
    %v310 = vld [vmem:[#allocation13 + $0xb0] sm:$0xf]
    %v311 = vld [vmem:[#allocation13 + $0xb4] sm:$0xf]
    %v312 = vld [vmem:[#allocation13 + $0xb8] sm:$0xf]
    %v313 = vld [vmem:[#allocation13 + $0xbc] sm:$0xf]
    %v314 = vld [vmem:[#allocation13 + $0xc0] sm:$0xf]
    %v315 = vld [vmem:[#allocation13 + $0xc4] sm:$0xf]
    %v316 = vld [vmem:[#allocation13 + $0xc8] sm:$0xf]
    %v317 = vld [vmem:[#allocation13 + $0xcc] sm:$0xf]
    %v318 = vld [vmem:[#allocation13 + $0xd0] sm:$0xf]
    %v319 = vld [vmem:[#allocation13 + $0xd4] sm:$0xf]
    %v320 = vld [vmem:[#allocation13 + $0xd8] sm:$0xf]
    %v321 = vld [vmem:[#allocation13 + $0xdc] sm:$0xf]
    %v322 = vld [vmem:[#allocation13 + $0xe0] sm:$0xf]
    %v323 = vld [vmem:[#allocation13 + $0xe4] sm:$0xf]
    %v324 = vld [vmem:[#allocation13 + $0xe8] sm:$0xf]
    %v325 = vld [vmem:[#allocation13 + $0xec] sm:$0xf]
    %v326 = vld [vmem:[#allocation13 + $0xf0] sm:$0xf]
    %v327 = vld [vmem:[#allocation13 + $0xf4] sm:$0xf]
    %v328 = vld [vmem:[#allocation13 + $0xf8] sm:$0xf]
    %v329 = vld [vmem:[#allocation13 + $0xfc] sm:$0xf]
    %v330 = vld [vmem:[#allocation13 + $0x100] sm:$0xf]
    %v331 = vld [vmem:[#allocation13 + $0x104] sm:$0xf]
    %v332 = vld [vmem:[#allocation13 + $0x108] sm:$0xf]
    %v333 = vld [vmem:[#allocation13 + $0x10c] sm:$0xf]
    %v334 = vld [vmem:[#allocation13 + $0x110] sm:$0xf]
    %v335 = vld [vmem:[#allocation13 + $0x114] sm:$0xf]
    %v336 = vld [vmem:[#allocation13 + $0x118] sm:$0xf]
    %v337 = vld [vmem:[#allocation13 + $0x11c] sm:$0xf]
    %v338 = vld [vmem:[#allocation13 + $0x120] sm:$0xf]
    %v339 = vld [vmem:[#allocation13 + $0x124] sm:$0xf]
    %v340 = vld [vmem:[#allocation13 + $0x128] sm:$0xf]
    %v341 = vld [vmem:[#allocation13 + $0x12c] sm:$0xf]
    %v342 = vld [vmem:[#allocation13 + $0x130] sm:$0xf]
    %v343 = vld [vmem:[#allocation13 + $0x134] sm:$0xf]
    %v344 = vld [vmem:[#allocation13 + $0x138] sm:$0xf]
    %v345 = vld [vmem:[#allocation13 + $0x13c] sm:$0xf]
    %v346 = vld [vmem:[#allocation13 + $0x140] sm:$0xf]
    %v347 = vld [vmem:[#allocation13 + $0x144] sm:$0xf]
    %v348 = vld [vmem:[#allocation13 + $0x148] sm:$0xf]
    %v349 = vld [vmem:[#allocation13 + $0x14c] sm:$0xf]
    %v350 = vld [vmem:[#allocation13 + $0x150] sm:$0xf]
    %v351 = vld [vmem:[#allocation13 + $0x154] sm:$0xf]
    %v352 = vld [vmem:[#allocation13 + $0x158] sm:$0xf]
    %v353 = vld [vmem:[#allocation13 + $0x15c] sm:$0xf]
    %v354 = vld [vmem:[#allocation13 + $0x160] sm:$0xf]
    %v355 = vld [vmem:[#allocation13 + $0x164] sm:$0xf]
    %v356 = vld [vmem:[#allocation13 + $0x168] sm:$0xf]
    %v357 = vld [vmem:[#allocation13 + $0x16c] sm:$0xf]
    %v358 = vld [vmem:[#allocation13 + $0x170] sm:$0xf]
    %v359 = vld [vmem:[#allocation13 + $0x174] sm:$0xf]
    %v360 = vld [vmem:[#allocation13 + $0x178] sm:$0xf]
    %v361 = vld [vmem:[#allocation13 + $0x17c] sm:$0xf]
    %v362 = vld [vmem:[#allocation13 + $0x180] sm:$0xf]
    %v363 = vld [vmem:[#allocation13 + $0x184] sm:$0xf]
    %v364 = vstv %s120
    %v365 = vmul.f32 %v153, %v364
    %v366 = vmul.f32 %v154, %v364
    %v367 = vmul.f32 %v155, %v364
    %v368 = vmul.f32 %v156, %v364
    %v369 = vmul.f32 %v157, %v364
    %v370 = vmul.f32 %v158, %v364
    %v371 = vmul.f32 %v159, %v364
    %v372 = vstv %s121
    %v373 = vmul.f32 %v176, %v372
    %v374 = vmul.f32 %v177, %v372
    %v375 = vmul.f32 %v178, %v372
    %v376 = vmul.f32 %v179, %v372
    %v377 = vmul.f32 %v180, %v372
    %v378 = vmul.f32 %v181, %v372
    %v379 = vmul.f32 %v182, %v372
    %v380 = vadd.f32 %v365, %v373
    %v381 = vadd.f32 %v366, %v374
    %v382 = vadd.f32 %v367, %v375
    %v383 = vadd.f32 %v368, %v376
    %v384 = vadd.f32 %v369, %v377
    %v385 = vadd.f32 %v370, %v378
    %v386 = vadd.f32 %v371, %v379
    %v387 = vstv %s122
    %v388 = vmul.f32 %v199, %v387
    %v389 = vmul.f32 %v200, %v387
    %v390 = vmul.f32 %v201, %v387
    %v391 = vmul.f32 %v202, %v387
    %v392 = vmul.f32 %v203, %v387
    %v393 = vmul.f32 %v204, %v387
    %v394 = vmul.f32 %v205, %v387
    %v395 = vadd.f32 %v380, %v388
    %v396 = vadd.f32 %v381, %v389
    %v397 = vadd.f32 %v382, %v390
    %v398 = vadd.f32 %v383, %v391
    %v399 = vadd.f32 %v384, %v392
    %v400 = vadd.f32 %v385, %v393
    %v401 = vadd.f32 %v386, %v394
    %v402 = vstv %s133
    %v403 = vadd.f32 %v395, %v402
    %v404 = vadd.f32 %v396, %v402
    %v405 = vadd.f32 %v397, %v402
    %v406 = vadd.f32 %v398, %v402
    %v407 = vadd.f32 %v399, %v402
    %v408 = vadd.f32 %v400, %v402
    %v409 = vadd.f32 %v401, %v402
    %v410 = vmax.f32 %v403, 0.0
    %v411 = vmax.f32 %v404, 0.0
    %v412 = vmax.f32 %v405, 0.0
    %v413 = vmax.f32 %v406, 0.0
    %v414 = vmax.f32 %v407, 0.0
    %v415 = vmax.f32 %v408, 0.0
    %v416 = vmax.f32 %v409, 0.0
    %v417 = vpack.c.bf16 %v410, %v410
    %v418 = vpack.c.bf16 %v411, %v411
    %v419 = vpack.c.bf16 %v412, %v412
    %v420 = vpack.c.bf16 %v413, %v413
    %v421 = vpack.c.bf16 %v414, %v414
    %v422 = vpack.c.bf16 %v415, %v415
    %v423 = vpack.c.bf16 %v416, %v416
    %s424 = scalar_lea.vmem [#allocation13], 392
    %v425 = vld [vmem:[%s424] sm:$0xf]
    %v426 = vld [vmem:[%s424 + $0x4] sm:$0xf]
    %v427 = vld [vmem:[%s424 + $0x8] sm:$0xf]
    %v428 = vld [vmem:[%s424 + $0xc] sm:$0xf]
    %v429 = vld [vmem:[%s424 + $0x10] sm:$0xf]
    %v430 = vld [vmem:[%s424 + $0x14] sm:$0xf]
    %v431 = vld [vmem:[%s424 + $0x18] sm:$0xf]
    %v432 = vld [vmem:[%s424 + $0x1c] sm:$0xf]
    %v433 = vld [vmem:[%s424 + $0x20] sm:$0xf]
    %v434 = vld [vmem:[%s424 + $0x24] sm:$0xf]
    %v435 = vld [vmem:[%s424 + $0x28] sm:$0xf]
    %v436 = vld [vmem:[%s424 + $0x2c] sm:$0xf]
    %v437 = vld [vmem:[%s424 + $0x30] sm:$0xf]
    %v438 = vld [vmem:[%s424 + $0x34] sm:$0xf]
    %v439 = vld [vmem:[%s424 + $0x38] sm:$0xf]
    %v440 = vld [vmem:[%s424 + $0x3c] sm:$0xf]
    %v441 = vld [vmem:[%s424 + $0x40] sm:$0xf]
    %v442 = vld [vmem:[%s424 + $0x44] sm:$0xf]
    %v443 = vld [vmem:[%s424 + $0x48] sm:$0xf]
    %v444 = vld [vmem:[%s424 + $0x4c] sm:$0xf]
    %v445 = vld [vmem:[%s424 + $0x50] sm:$0xf]
    %v446 = vld [vmem:[%s424 + $0x54] sm:$0xf]
    %v447 = vld [vmem:[%s424 + $0x58] sm:$0xf]
    %v448 = vld [vmem:[%s424 + $0x5c] sm:$0xf]
    %v449 = vld [vmem:[%s424 + $0x60] sm:$0xf]
    %v450 = vld [vmem:[%s424 + $0x64] sm:$0xf]
    %v451 = vld [vmem:[%s424 + $0x68] sm:$0xf]
    %v452 = vld [vmem:[%s424 + $0x6c] sm:$0xf]
    %v453 = vld [vmem:[%s424 + $0x70] sm:$0xf]
    %v454 = vld [vmem:[%s424 + $0x74] sm:$0xf]
    %v455 = vld [vmem:[%s424 + $0x78] sm:$0xf]
    %v456 = vld [vmem:[%s424 + $0x7c] sm:$0xf]
    %v457 = vld [vmem:[%s424 + $0x80] sm:$0xf]
    %v458 = vld [vmem:[%s424 + $0x84] sm:$0xf]
    %v459 = vld [vmem:[%s424 + $0x88] sm:$0xf]
    %v460 = vld [vmem:[%s424 + $0x8c] sm:$0xf]
    %v461 = vld [vmem:[%s424 + $0x90] sm:$0xf]
    %v462 = vld [vmem:[%s424 + $0x94] sm:$0xf]
    %v463 = vld [vmem:[%s424 + $0x98] sm:$0xf]
    %v464 = vld [vmem:[%s424 + $0x9c] sm:$0xf]
    %v465 = vld [vmem:[%s424 + $0xa0] sm:$0xf]
    %v466 = vld [vmem:[%s424 + $0xa4] sm:$0xf]
    %v467 = vld [vmem:[%s424 + $0xa8] sm:$0xf]
    %v468 = vld [vmem:[%s424 + $0xac] sm:$0xf]
    %v469 = vld [vmem:[%s424 + $0xb0] sm:$0xf]
    %v470 = vld [vmem:[%s424 + $0xb4] sm:$0xf]
    %v471 = vld [vmem:[%s424 + $0xb8] sm:$0xf]
    %v472 = vld [vmem:[%s424 + $0xbc] sm:$0xf]
    %v473 = vld [vmem:[%s424 + $0xc0] sm:$0xf]
    %v474 = vld [vmem:[%s424 + $0xc4] sm:$0xf]
    %v475 = vld [vmem:[%s424 + $0xc8] sm:$0xf]
    %v476 = vld [vmem:[%s424 + $0xcc] sm:$0xf]
    %v477 = vld [vmem:[%s424 + $0xd0] sm:$0xf]
    %v478 = vld [vmem:[%s424 + $0xd4] sm:$0xf]
    %v479 = vld [vmem:[%s424 + $0xd8] sm:$0xf]
    %v480 = vld [vmem:[%s424 + $0xdc] sm:$0xf]
    %v481 = vld [vmem:[%s424 + $0xe0] sm:$0xf]
    %v482 = vld [vmem:[%s424 + $0xe4] sm:$0xf]
    %v483 = vld [vmem:[%s424 + $0xe8] sm:$0xf]
    %v484 = vld [vmem:[%s424 + $0xec] sm:$0xf]
    %v485 = vld [vmem:[%s424 + $0xf0] sm:$0xf]
    %v486 = vld [vmem:[%s424 + $0xf4] sm:$0xf]
    %v487 = vld [vmem:[%s424 + $0xf8] sm:$0xf]
    %v488 = vld [vmem:[%s424 + $0xfc] sm:$0xf]
    %v489 = vld [vmem:[%s424 + $0x100] sm:$0xf]
    %v490 = vld [vmem:[%s424 + $0x104] sm:$0xf]
    %v491 = vld [vmem:[%s424 + $0x108] sm:$0xf]
    %v492 = vld [vmem:[%s424 + $0x10c] sm:$0xf]
    %v493 = vld [vmem:[%s424 + $0x110] sm:$0xf]
    %v494 = vld [vmem:[%s424 + $0x114] sm:$0xf]
    %v495 = vld [vmem:[%s424 + $0x118] sm:$0xf]
    %v496 = vld [vmem:[%s424 + $0x11c] sm:$0xf]
    %v497 = vld [vmem:[%s424 + $0x120] sm:$0xf]
    %v498 = vld [vmem:[%s424 + $0x124] sm:$0xf]
    %v499 = vld [vmem:[%s424 + $0x128] sm:$0xf]
    %v500 = vld [vmem:[%s424 + $0x12c] sm:$0xf]
    %v501 = vld [vmem:[%s424 + $0x130] sm:$0xf]
    %v502 = vld [vmem:[%s424 + $0x134] sm:$0xf]
    %v503 = vld [vmem:[%s424 + $0x138] sm:$0xf]
    %v504 = vld [vmem:[%s424 + $0x13c] sm:$0xf]
    %v505 = vld [vmem:[%s424 + $0x140] sm:$0xf]
    %v506 = vld [vmem:[%s424 + $0x144] sm:$0xf]
    %v507 = vld [vmem:[%s424 + $0x148] sm:$0xf]
    %v508 = vld [vmem:[%s424 + $0x14c] sm:$0xf]
    %v509 = vld [vmem:[%s424 + $0x150] sm:$0xf]
    %v510 = vld [vmem:[%s424 + $0x154] sm:$0xf]
    %v511 = vld [vmem:[%s424 + $0x158] sm:$0xf]
    %v512 = vld [vmem:[%s424 + $0x15c] sm:$0xf]
    %v513 = vld [vmem:[%s424 + $0x160] sm:$0xf]
    %v514 = vld [vmem:[%s424 + $0x164] sm:$0xf]
    %v515 = vld [vmem:[%s424 + $0x168] sm:$0xf]
    %v516 = vld [vmem:[%s424 + $0x16c] sm:$0xf]
    %v517 = vld [vmem:[%s424 + $0x170] sm:$0xf]
    %v518 = vld [vmem:[%s424 + $0x174] sm:$0xf]
    %v519 = vld [vmem:[%s424 + $0x178] sm:$0xf]
    %v520 = vld [vmem:[%s424 + $0x17c] sm:$0xf]
    %v521 = vld [vmem:[%s424 + $0x180] sm:$0xf]
    %v522 = vld [vmem:[%s424 + $0x184] sm:$0xf]
    %v621 = vunpack.c.l.b16 %v425
    %v622 = vunpack.c.l.b16 %v426
    %v623 = vunpack.c.l.b16 %v427
    %v624 = vunpack.c.l.b16 %v428
    %v625 = vunpack.c.l.b16 %v429
    %v626 = vunpack.c.l.b16 %v430
    %v627 = vunpack.c.l.b16 %v431
    %v628 = vunpack.c.l.b16 %v432
    %v629 = vunpack.c.l.b16 %v433
    %v630 = vunpack.c.l.b16 %v434
    %v631 = vunpack.c.l.b16 %v435
    %v632 = vunpack.c.l.b16 %v436
    %v633 = vunpack.c.l.b16 %v437
    %v634 = vunpack.c.l.b16 %v438
    %v635 = vunpack.c.l.b16 %v439
    %v636 = vunpack.c.l.b16 %v440
    %v637 = vunpack.c.l.b16 %v441
    %v638 = vunpack.c.l.b16 %v442
    %v639 = vunpack.c.l.b16 %v443
    %v640 = vunpack.c.l.b16 %v444
    %v641 = vunpack.c.l.b16 %v445
    %v642 = vunpack.c.l.b16 %v446
    %v643 = vunpack.c.l.b16 %v447
    %v644 = vunpack.c.l.b16 %v448
    %v645 = vunpack.c.l.b16 %v449
    %v646 = vunpack.c.l.b16 %v450
    %v647 = vunpack.c.l.b16 %v451
    %v648 = vunpack.c.l.b16 %v452
    %v649 = vunpack.c.l.b16 %v453
    %v650 = vunpack.c.l.b16 %v454
    %v651 = vunpack.c.l.b16 %v455
    %v652 = vunpack.c.l.b16 %v456
    %v653 = vunpack.c.l.b16 %v457
    %v654 = vunpack.c.l.b16 %v458
    %v655 = vunpack.c.l.b16 %v459
    %v656 = vunpack.c.l.b16 %v460
    %v657 = vunpack.c.l.b16 %v461
    %v658 = vunpack.c.l.b16 %v462
    %v659 = vunpack.c.l.b16 %v463
    %v660 = vunpack.c.l.b16 %v464
    %v661 = vunpack.c.l.b16 %v465
    %v662 = vunpack.c.l.b16 %v466
    %v663 = vunpack.c.l.b16 %v467
    %v664 = vunpack.c.l.b16 %v468
    %v665 = vunpack.c.l.b16 %v469
    %v666 = vunpack.c.l.b16 %v470
    %v667 = vunpack.c.l.b16 %v471
    %v668 = vunpack.c.l.b16 %v472
    %v669 = vunpack.c.l.b16 %v473
    %v670 = vunpack.c.l.b16 %v474
    %v671 = vunpack.c.l.b16 %v475
    %v672 = vunpack.c.l.b16 %v476
    %v673 = vunpack.c.l.b16 %v477
    %v674 = vunpack.c.l.b16 %v478
    %v675 = vunpack.c.l.b16 %v479
    %v676 = vunpack.c.l.b16 %v480
    %v677 = vunpack.c.l.b16 %v481
    %v678 = vunpack.c.l.b16 %v482
    %v679 = vunpack.c.l.b16 %v483
    %v680 = vunpack.c.l.b16 %v484
    %v681 = vunpack.c.l.b16 %v485
    %v682 = vunpack.c.l.b16 %v486
    %v683 = vunpack.c.l.b16 %v487
    %v684 = vunpack.c.l.b16 %v488
    %v685 = vunpack.c.l.b16 %v489
    %v686 = vunpack.c.l.b16 %v490
    %v687 = vunpack.c.l.b16 %v491
    %v688 = vunpack.c.l.b16 %v492
    %v689 = vunpack.c.l.b16 %v493
    %v690 = vunpack.c.l.b16 %v494
    %v691 = vunpack.c.l.b16 %v495
    %v692 = vunpack.c.l.b16 %v496
    %v693 = vunpack.c.l.b16 %v497
    %v694 = vunpack.c.l.b16 %v498
    %v695 = vunpack.c.l.b16 %v499
    %v696 = vunpack.c.l.b16 %v500
    %v697 = vunpack.c.l.b16 %v501
    %v698 = vunpack.c.l.b16 %v502
    %v699 = vunpack.c.l.b16 %v503
    %v700 = vunpack.c.l.b16 %v504
    %v701 = vunpack.c.l.b16 %v505
    %v702 = vunpack.c.l.b16 %v506
    %v703 = vunpack.c.l.b16 %v507
    %v704 = vunpack.c.l.b16 %v508
    %v705 = vunpack.c.l.b16 %v509
    %v706 = vunpack.c.l.b16 %v510
    %v707 = vunpack.c.l.b16 %v511
    %v708 = vunpack.c.l.b16 %v512
    %v709 = vunpack.c.l.b16 %v513
    %v710 = vunpack.c.l.b16 %v514
    %v711 = vunpack.c.l.b16 %v515
    %v712 = vunpack.c.l.b16 %v516
    %v713 = vunpack.c.l.b16 %v517
    %v714 = vunpack.c.l.b16 %v518
    %v715 = vunpack.c.l.b16 %v519
    %v716 = vunpack.c.l.b16 %v520
    %v717 = vunpack.c.l.b16 %v521
    %v718 = vunpack.c.l.b16 %v522
    %v719 = vpack.c.b16 %v622, %v621
    %v720 = vpack.c.b16 %v624, %v623
    %v721 = vpack.c.b16 %v626, %v625
    %v722 = vpack.c.b16 %v628, %v627
    %v723 = vpack.c.b16 %v630, %v629
    %v724 = vpack.c.b16 %v632, %v631
    %v725 = vpack.c.b16 %v634, %v633
    %v726 = vpack.c.b16 %v636, %v635
    %v727 = vpack.c.b16 %v638, %v637
    %v728 = vpack.c.b16 %v640, %v639
    %v729 = vpack.c.b16 %v642, %v641
    %v730 = vpack.c.b16 %v644, %v643
    %v731 = vpack.c.b16 %v646, %v645
    %v732 = vpack.c.b16 %v648, %v647
    %v733 = vpack.c.b16 %v650, %v649
    %v734 = vpack.c.b16 %v652, %v651
    %v735 = vpack.c.b16 %v654, %v653
    %v736 = vpack.c.b16 %v656, %v655
    %v737 = vpack.c.b16 %v658, %v657
    %v738 = vpack.c.b16 %v660, %v659
    %v739 = vpack.c.b16 %v662, %v661
    %v740 = vpack.c.b16 %v664, %v663
    %v741 = vpack.c.b16 %v666, %v665
    %v742 = vpack.c.b16 %v668, %v667
    %v743 = vpack.c.b16 %v670, %v669
    %v744 = vpack.c.b16 %v672, %v671
    %v745 = vpack.c.b16 %v674, %v673
    %v746 = vpack.c.b16 %v676, %v675
    %v747 = vpack.c.b16 %v678, %v677
    %v748 = vpack.c.b16 %v680, %v679
    %v749 = vpack.c.b16 %v682, %v681
    %v750 = vpack.c.b16 %v684, %v683
    %v751 = vpack.c.b16 %v686, %v685
    %v752 = vpack.c.b16 %v688, %v687
    %v753 = vpack.c.b16 %v690, %v689
    %v754 = vpack.c.b16 %v692, %v691
    %v755 = vpack.c.b16 %v694, %v693
    %v756 = vpack.c.b16 %v696, %v695
    %v757 = vpack.c.b16 %v698, %v697
    %v758 = vpack.c.b16 %v700, %v699
    %v759 = vpack.c.b16 %v702, %v701
    %v760 = vpack.c.b16 %v704, %v703
    %v761 = vpack.c.b16 %v706, %v705
    %v762 = vpack.c.b16 %v708, %v707
    %v763 = vpack.c.b16 %v710, %v709
    %v764 = vpack.c.b16 %v712, %v711
    %v765 = vpack.c.b16 %v714, %v713
    %v766 = vpack.c.b16 %v716, %v715
    %v767 = vpack.c.b16 %v718, %v717
    %vm817 = vcmask 130048
    %v819 = vsel %vm817, %v423, 0
    %821 = vmatpush.bf16.msra.mxu0 %v726
    %822 = vmatpush.bf16.msra.mxu0 %v725
    %823 = vmatpush.bf16.msra.mxu0 %v724
    %824 = vmatpush.bf16.msra.mxu0 %v723
    %825 = vmatpush.bf16.msra.mxu0 %v722
    %826 = vmatpush.bf16.msra.mxu0 %v721
    %827 = vmatpush.bf16.msra.mxu0 %v720
    %828 = vmatpush.bf16.msra.mxu0 %v719
    %829 = vmatmul.bf16.gmra.mxu0 %v417
    %v830 = vpop.f32.mrf.mxu0
    %v831 = vadd.f32 0.0, %v830
    %v832 = vpop.f32.mrf.mxu0
    %833 = vdwg.mxu0
    %834 = vmatpush.bf16.msra.mxu0 %v734
    %835 = vmatpush.bf16.msra.mxu0 %v733
    %836 = vmatpush.bf16.msra.mxu0 %v732
    %837 = vmatpush.bf16.msra.mxu0 %v731
    %838 = vmatpush.bf16.msra.mxu0 %v730
    %839 = vmatpush.bf16.msra.mxu0 %v729
    %840 = vmatpush.bf16.msra.mxu0 %v728
    %841 = vmatpush.bf16.msra.mxu0 %v727
    %842 = vmatmul.bf16.gmra.mxu0 %v418
    %v843 = vpop.f32.mrf.mxu0
    %v844 = vadd.f32 %v831, %v843
    %v845 = vpop.f32.mrf.mxu0
    %846 = vdwg.mxu0
    %847 = vmatpush.bf16.msra.mxu0 %v742
    %848 = vmatpush.bf16.msra.mxu0 %v741
    %849 = vmatpush.bf16.msra.mxu0 %v740
    %850 = vmatpush.bf16.msra.mxu0 %v739
    %851 = vmatpush.bf16.msra.mxu0 %v738
    %852 = vmatpush.bf16.msra.mxu0 %v737
    %853 = vmatpush.bf16.msra.mxu0 %v736
    %854 = vmatpush.bf16.msra.mxu0 %v735
    %855 = vmatmul.bf16.gmra.mxu0 %v419
    %v856 = vpop.f32.mrf.mxu0
    %v857 = vadd.f32 %v844, %v856
    %v858 = vpop.f32.mrf.mxu0
    %859 = vdwg.mxu0
    %860 = vmatpush.bf16.msra.mxu0 %v750
    %861 = vmatpush.bf16.msra.mxu0 %v749
    %862 = vmatpush.bf16.msra.mxu0 %v748
    %863 = vmatpush.bf16.msra.mxu0 %v747
    %864 = vmatpush.bf16.msra.mxu0 %v746
    %865 = vmatpush.bf16.msra.mxu0 %v745
    %866 = vmatpush.bf16.msra.mxu0 %v744
    %867 = vmatpush.bf16.msra.mxu0 %v743
    %868 = vmatmul.bf16.gmra.mxu0 %v420
    %v869 = vpop.f32.mrf.mxu0
    %v870 = vadd.f32 %v857, %v869
    %v871 = vpop.f32.mrf.mxu0
    %872 = vdwg.mxu0
    %873 = vmatpush.bf16.msra.mxu0 %v758
    %874 = vmatpush.bf16.msra.mxu0 %v757
    %875 = vmatpush.bf16.msra.mxu0 %v756
    %876 = vmatpush.bf16.msra.mxu0 %v755
    %877 = vmatpush.bf16.msra.mxu0 %v754
    %878 = vmatpush.bf16.msra.mxu0 %v753
    %879 = vmatpush.bf16.msra.mxu0 %v752
    %880 = vmatpush.bf16.msra.mxu0 %v751
    %881 = vmatmul.bf16.gmra.mxu0 %v421
    %v882 = vpop.f32.mrf.mxu0
    %v883 = vadd.f32 %v870, %v882
    %v884 = vpop.f32.mrf.mxu0
    %885 = vdwg.mxu0
    %886 = vmatpush.bf16.msra.mxu0 %v766
    %887 = vmatpush.bf16.msra.mxu0 %v765
    %888 = vmatpush.bf16.msra.mxu0 %v764
    %889 = vmatpush.bf16.msra.mxu0 %v763
    %890 = vmatpush.bf16.msra.mxu0 %v762
    %891 = vmatpush.bf16.msra.mxu0 %v761
    %892 = vmatpush.bf16.msra.mxu0 %v760
    %893 = vmatpush.bf16.msra.mxu0 %v759
    %894 = vmatmul.bf16.gmra.mxu0 %v422
    %v895 = vpop.f32.mrf.mxu0
    %v896 = vadd.f32 %v883, %v895
    %v897 = vpop.f32.mrf.mxu0
    %898 = vdwg.mxu0
    %899 = vmatpush.bf16.msra.mxu0 0
    %900 = vmatpush.bf16.msra.mxu0 0
    %901 = vmatpush.bf16.msra.mxu0 0
    %902 = vmatpush.bf16.msra.mxu0 0
    %903 = vmatpush.bf16.msra.mxu0 0
    %904 = vmatpush.bf16.msra.mxu0 0
    %905 = vmatpush.bf16.msra.mxu0 0
    %906 = vmatpush.bf16.msra.mxu0 %v767
    %907 = vmatmul.bf16.gmra.mxu0 %v819
    %v908 = vpop.f32.mrf.mxu0
    %v909 = vadd.f32 %v896, %v908
    %v910 = vpop.f32.mrf.mxu0
    %911 = vdwg.mxu0
    %v1010 = vunpack.c.l.b16 %v266
    %v1011 = vunpack.c.l.b16 %v267
    %v1012 = vunpack.c.l.b16 %v268
    %v1013 = vunpack.c.l.b16 %v269
    %v1014 = vunpack.c.l.b16 %v270
    %v1015 = vunpack.c.l.b16 %v271
    %v1016 = vunpack.c.l.b16 %v272
    %v1017 = vunpack.c.l.b16 %v273
    %v1018 = vunpack.c.l.b16 %v274
    %v1019 = vunpack.c.l.b16 %v275
    %v1020 = vunpack.c.l.b16 %v276
    %v1021 = vunpack.c.l.b16 %v277
    %v1022 = vunpack.c.l.b16 %v278
    %v1023 = vunpack.c.l.b16 %v279
    %v1024 = vunpack.c.l.b16 %v280
    %v1025 = vunpack.c.l.b16 %v281
    %v1026 = vunpack.c.l.b16 %v282
    %v1027 = vunpack.c.l.b16 %v283
    %v1028 = vunpack.c.l.b16 %v284
    %v1029 = vunpack.c.l.b16 %v285
    %v1030 = vunpack.c.l.b16 %v286
    %v1031 = vunpack.c.l.b16 %v287
    %v1032 = vunpack.c.l.b16 %v288
    %v1033 = vunpack.c.l.b16 %v289
    %v1034 = vunpack.c.l.b16 %v290
    %v1035 = vunpack.c.l.b16 %v291
    %v1036 = vunpack.c.l.b16 %v292
    %v1037 = vunpack.c.l.b16 %v293
    %v1038 = vunpack.c.l.b16 %v294
    %v1039 = vunpack.c.l.b16 %v295
    %v1040 = vunpack.c.l.b16 %v296
    %v1041 = vunpack.c.l.b16 %v297
    %v1042 = vunpack.c.l.b16 %v298
    %v1043 = vunpack.c.l.b16 %v299
    %v1044 = vunpack.c.l.b16 %v300
    %v1045 = vunpack.c.l.b16 %v301
    %v1046 = vunpack.c.l.b16 %v302
    %v1047 = vunpack.c.l.b16 %v303
    %v1048 = vunpack.c.l.b16 %v304
    %v1049 = vunpack.c.l.b16 %v305
    %v1050 = vunpack.c.l.b16 %v306
    %v1051 = vunpack.c.l.b16 %v307
    %v1052 = vunpack.c.l.b16 %v308
    %v1053 = vunpack.c.l.b16 %v309
    %v1054 = vunpack.c.l.b16 %v310
    %v1055 = vunpack.c.l.b16 %v311
    %v1056 = vunpack.c.l.b16 %v312
    %v1057 = vunpack.c.l.b16 %v313
    %v1058 = vunpack.c.l.b16 %v314
    %v1059 = vunpack.c.l.b16 %v315
    %v1060 = vunpack.c.l.b16 %v316
    %v1061 = vunpack.c.l.b16 %v317
    %v1062 = vunpack.c.l.b16 %v318
    %v1063 = vunpack.c.l.b16 %v319
    %v1064 = vunpack.c.l.b16 %v320
    %v1065 = vunpack.c.l.b16 %v321
    %v1066 = vunpack.c.l.b16 %v322
    %v1067 = vunpack.c.l.b16 %v323
    %v1068 = vunpack.c.l.b16 %v324
    %v1069 = vunpack.c.l.b16 %v325
    %v1070 = vunpack.c.l.b16 %v326
    %v1071 = vunpack.c.l.b16 %v327
    %v1072 = vunpack.c.l.b16 %v328
    %v1073 = vunpack.c.l.b16 %v329
    %v1074 = vunpack.c.l.b16 %v330
    %v1075 = vunpack.c.l.b16 %v331
    %v1076 = vunpack.c.l.b16 %v332
    %v1077 = vunpack.c.l.b16 %v333
    %v1078 = vunpack.c.l.b16 %v334
    %v1079 = vunpack.c.l.b16 %v335
    %v1080 = vunpack.c.l.b16 %v336
    %v1081 = vunpack.c.l.b16 %v337
    %v1082 = vunpack.c.l.b16 %v338
    %v1083 = vunpack.c.l.b16 %v339
    %v1084 = vunpack.c.l.b16 %v340
    %v1085 = vunpack.c.l.b16 %v341
    %v1086 = vunpack.c.l.b16 %v342
    %v1087 = vunpack.c.l.b16 %v343
    %v1088 = vunpack.c.l.b16 %v344
    %v1089 = vunpack.c.l.b16 %v345
    %v1090 = vunpack.c.l.b16 %v346
    %v1091 = vunpack.c.l.b16 %v347
    %v1092 = vunpack.c.l.b16 %v348
    %v1093 = vunpack.c.l.b16 %v349
    %v1094 = vunpack.c.l.b16 %v350
    %v1095 = vunpack.c.l.b16 %v351
    %v1096 = vunpack.c.l.b16 %v352
    %v1097 = vunpack.c.l.b16 %v353
    %v1098 = vunpack.c.l.b16 %v354
    %v1099 = vunpack.c.l.b16 %v355
    %v1100 = vunpack.c.l.b16 %v356
    %v1101 = vunpack.c.l.b16 %v357
    %v1102 = vunpack.c.l.b16 %v358
    %v1103 = vunpack.c.l.b16 %v359
    %v1104 = vunpack.c.l.b16 %v360
    %v1105 = vunpack.c.l.b16 %v361
    %v1106 = vunpack.c.l.b16 %v362
    %v1107 = vunpack.c.l.b16 %v363
    %v1108 = vpack.c.b16 %v1011, %v1010
    %v1109 = vpack.c.b16 %v1013, %v1012
    %v1110 = vpack.c.b16 %v1015, %v1014
    %v1111 = vpack.c.b16 %v1017, %v1016
    %v1112 = vpack.c.b16 %v1019, %v1018
    %v1113 = vpack.c.b16 %v1021, %v1020
    %v1114 = vpack.c.b16 %v1023, %v1022
    %v1115 = vpack.c.b16 %v1025, %v1024
    %v1116 = vpack.c.b16 %v1027, %v1026
    %v1117 = vpack.c.b16 %v1029, %v1028
    %v1118 = vpack.c.b16 %v1031, %v1030
    %v1119 = vpack.c.b16 %v1033, %v1032
    %v1120 = vpack.c.b16 %v1035, %v1034
    %v1121 = vpack.c.b16 %v1037, %v1036
    %v1122 = vpack.c.b16 %v1039, %v1038
    %v1123 = vpack.c.b16 %v1041, %v1040
    %v1124 = vpack.c.b16 %v1043, %v1042
    %v1125 = vpack.c.b16 %v1045, %v1044
    %v1126 = vpack.c.b16 %v1047, %v1046
    %v1127 = vpack.c.b16 %v1049, %v1048
    %v1128 = vpack.c.b16 %v1051, %v1050
    %v1129 = vpack.c.b16 %v1053, %v1052
    %v1130 = vpack.c.b16 %v1055, %v1054
    %v1131 = vpack.c.b16 %v1057, %v1056
    %v1132 = vpack.c.b16 %v1059, %v1058
    %v1133 = vpack.c.b16 %v1061, %v1060
    %v1134 = vpack.c.b16 %v1063, %v1062
    %v1135 = vpack.c.b16 %v1065, %v1064
    %v1136 = vpack.c.b16 %v1067, %v1066
    %v1137 = vpack.c.b16 %v1069, %v1068
    %v1138 = vpack.c.b16 %v1071, %v1070
    %v1139 = vpack.c.b16 %v1073, %v1072
    %v1140 = vpack.c.b16 %v1075, %v1074
    %v1141 = vpack.c.b16 %v1077, %v1076
    %v1142 = vpack.c.b16 %v1079, %v1078
    %v1143 = vpack.c.b16 %v1081, %v1080
    %v1144 = vpack.c.b16 %v1083, %v1082
    %v1145 = vpack.c.b16 %v1085, %v1084
    %v1146 = vpack.c.b16 %v1087, %v1086
    %v1147 = vpack.c.b16 %v1089, %v1088
    %v1148 = vpack.c.b16 %v1091, %v1090
    %v1149 = vpack.c.b16 %v1093, %v1092
    %v1150 = vpack.c.b16 %v1095, %v1094
    %v1151 = vpack.c.b16 %v1097, %v1096
    %v1152 = vpack.c.b16 %v1099, %v1098
    %v1153 = vpack.c.b16 %v1101, %v1100
    %v1154 = vpack.c.b16 %v1103, %v1102
    %v1155 = vpack.c.b16 %v1105, %v1104
    %v1156 = vpack.c.b16 %v1107, %v1106
    %v1207 = vsel %vm817, %v265, 0
    %1209 = vmatpush.bf16.msra.mxu0 %v1115
    %1210 = vmatpush.bf16.msra.mxu0 %v1114
    %1211 = vmatpush.bf16.msra.mxu0 %v1113
    %1212 = vmatpush.bf16.msra.mxu0 %v1112
    %1213 = vmatpush.bf16.msra.mxu0 %v1111
    %1214 = vmatpush.bf16.msra.mxu0 %v1110
    %1215 = vmatpush.bf16.msra.mxu0 %v1109
    %1216 = vmatpush.bf16.msra.mxu0 %v1108
    %1217 = vmatmul.bf16.gmra.mxu0 %v259
    %v1218 = vpop.f32.mrf.mxu0
    %v1219 = vadd.f32 %v909, %v1218
    %v1220 = vpop.f32.mrf.mxu0
    %1221 = vdwg.mxu0
    %1222 = vmatpush.bf16.msra.mxu0 %v1123
    %1223 = vmatpush.bf16.msra.mxu0 %v1122
    %1224 = vmatpush.bf16.msra.mxu0 %v1121
    %1225 = vmatpush.bf16.msra.mxu0 %v1120
    %1226 = vmatpush.bf16.msra.mxu0 %v1119
    %1227 = vmatpush.bf16.msra.mxu0 %v1118
    %1228 = vmatpush.bf16.msra.mxu0 %v1117
    %1229 = vmatpush.bf16.msra.mxu0 %v1116
    %1230 = vmatmul.bf16.gmra.mxu0 %v260
    %v1231 = vpop.f32.mrf.mxu0
    %v1232 = vadd.f32 %v1219, %v1231
    %v1233 = vpop.f32.mrf.mxu0
    %1234 = vdwg.mxu0
    %1235 = vmatpush.bf16.msra.mxu0 %v1131
    %1236 = vmatpush.bf16.msra.mxu0 %v1130
    %1237 = vmatpush.bf16.msra.mxu0 %v1129
    %1238 = vmatpush.bf16.msra.mxu0 %v1128
    %1239 = vmatpush.bf16.msra.mxu0 %v1127
    %1240 = vmatpush.bf16.msra.mxu0 %v1126
    %1241 = vmatpush.bf16.msra.mxu0 %v1125
    %1242 = vmatpush.bf16.msra.mxu0 %v1124
    %1243 = vmatmul.bf16.gmra.mxu0 %v261
    %v1244 = vpop.f32.mrf.mxu0
    %v1245 = vadd.f32 %v1232, %v1244
    %v1246 = vpop.f32.mrf.mxu0
    %1247 = vdwg.mxu0
    %1248 = vmatpush.bf16.msra.mxu0 %v1139
    %1249 = vmatpush.bf16.msra.mxu0 %v1138
    %1250 = vmatpush.bf16.msra.mxu0 %v1137
    %1251 = vmatpush.bf16.msra.mxu0 %v1136
    %1252 = vmatpush.bf16.msra.mxu0 %v1135
    %1253 = vmatpush.bf16.msra.mxu0 %v1134
    %1254 = vmatpush.bf16.msra.mxu0 %v1133
    %1255 = vmatpush.bf16.msra.mxu0 %v1132
    %1256 = vmatmul.bf16.gmra.mxu0 %v262
    %v1257 = vpop.f32.mrf.mxu0
    %v1258 = vadd.f32 %v1245, %v1257
    %v1259 = vpop.f32.mrf.mxu0
    %1260 = vdwg.mxu0
    %1261 = vmatpush.bf16.msra.mxu0 %v1147
    %1262 = vmatpush.bf16.msra.mxu0 %v1146
    %1263 = vmatpush.bf16.msra.mxu0 %v1145
    %1264 = vmatpush.bf16.msra.mxu0 %v1144
    %1265 = vmatpush.bf16.msra.mxu0 %v1143
    %1266 = vmatpush.bf16.msra.mxu0 %v1142
    %1267 = vmatpush.bf16.msra.mxu0 %v1141
    %1268 = vmatpush.bf16.msra.mxu0 %v1140
    %1269 = vmatmul.bf16.gmra.mxu0 %v263
    %v1270 = vpop.f32.mrf.mxu0
    %v1271 = vadd.f32 %v1258, %v1270
    %v1272 = vpop.f32.mrf.mxu0
    %1273 = vdwg.mxu0
    %1274 = vmatpush.bf16.msra.mxu0 %v1155
    %1275 = vmatpush.bf16.msra.mxu0 %v1154
    %1276 = vmatpush.bf16.msra.mxu0 %v1153
    %1277 = vmatpush.bf16.msra.mxu0 %v1152
    %1278 = vmatpush.bf16.msra.mxu0 %v1151
    %1279 = vmatpush.bf16.msra.mxu0 %v1150
    %1280 = vmatpush.bf16.msra.mxu0 %v1149
    %1281 = vmatpush.bf16.msra.mxu0 %v1148
    %1282 = vmatmul.bf16.gmra.mxu0 %v264
    %v1283 = vpop.f32.mrf.mxu0
    %v1284 = vadd.f32 %v1271, %v1283
    %v1285 = vpop.f32.mrf.mxu0
    %1286 = vdwg.mxu0
    %1287 = vmatpush.bf16.msra.mxu0 0
    %1288 = vmatpush.bf16.msra.mxu0 0
    %1289 = vmatpush.bf16.msra.mxu0 0
    %1290 = vmatpush.bf16.msra.mxu0 0
    %1291 = vmatpush.bf16.msra.mxu0 0
    %1292 = vmatpush.bf16.msra.mxu0 0
    %1293 = vmatpush.bf16.msra.mxu0 0
    %1294 = vmatpush.bf16.msra.mxu0 %v1156
    %1295 = vmatmul.bf16.gmra.mxu0 %v1207
    %v1296 = vpop.f32.mrf.mxu0
    %v1297 = vadd.f32 %v1284, %v1296
    %v1298 = vpop.f32.mrf.mxu0
    %1299 = vdwg.mxu0
    %v1300 = vstv %s123
    %v1301 = vmul.f32 %v153, %v1300
    %v1302 = vmul.f32 %v154, %v1300
    %v1303 = vmul.f32 %v155, %v1300
    %v1304 = vmul.f32 %v156, %v1300
    %v1305 = vmul.f32 %v157, %v1300
    %v1306 = vmul.f32 %v158, %v1300
    %v1307 = vmul.f32 %v159, %v1300
    %v1308 = vstv %s124
    %v1309 = vmul.f32 %v176, %v1308
    %v1310 = vmul.f32 %v177, %v1308
    %v1311 = vmul.f32 %v178, %v1308
    %v1312 = vmul.f32 %v179, %v1308
    %v1313 = vmul.f32 %v180, %v1308
    %v1314 = vmul.f32 %v181, %v1308
    %v1315 = vmul.f32 %v182, %v1308
    %v1316 = vadd.f32 %v1301, %v1309
    %v1317 = vadd.f32 %v1302, %v1310
    %v1318 = vadd.f32 %v1303, %v1311
    %v1319 = vadd.f32 %v1304, %v1312
    %v1320 = vadd.f32 %v1305, %v1313
    %v1321 = vadd.f32 %v1306, %v1314
    %v1322 = vadd.f32 %v1307, %v1315
    %v1323 = vstv %s125
    %v1324 = vmul.f32 %v199, %v1323
    %v1325 = vmul.f32 %v200, %v1323
    %v1326 = vmul.f32 %v201, %v1323
    %v1327 = vmul.f32 %v202, %v1323
    %v1328 = vmul.f32 %v203, %v1323
    %v1329 = vmul.f32 %v204, %v1323
    %v1330 = vmul.f32 %v205, %v1323
    %v1331 = vadd.f32 %v1316, %v1324
    %v1332 = vadd.f32 %v1317, %v1325
    %v1333 = vadd.f32 %v1318, %v1326
    %v1334 = vadd.f32 %v1319, %v1327
    %v1335 = vadd.f32 %v1320, %v1328
    %v1336 = vadd.f32 %v1321, %v1329
    %v1337 = vadd.f32 %v1322, %v1330
    %v1338 = vstv %s134
    %v1339 = vadd.f32 %v1331, %v1338
    %v1340 = vadd.f32 %v1332, %v1338
    %v1341 = vadd.f32 %v1333, %v1338
    %v1342 = vadd.f32 %v1334, %v1338
    %v1343 = vadd.f32 %v1335, %v1338
    %v1344 = vadd.f32 %v1336, %v1338
    %v1345 = vadd.f32 %v1337, %v1338
    %v1346 = vmax.f32 %v1339, 0.0
    %v1347 = vmax.f32 %v1340, 0.0
    %v1348 = vmax.f32 %v1341, 0.0
    %v1349 = vmax.f32 %v1342, 0.0
    %v1350 = vmax.f32 %v1343, 0.0
    %v1351 = vmax.f32 %v1344, 0.0
    %v1352 = vmax.f32 %v1345, 0.0
    %v1353 = vpack.c.bf16 %v1346, %v1346
    %v1354 = vpack.c.bf16 %v1347, %v1347
    %v1355 = vpack.c.bf16 %v1348, %v1348
    %v1356 = vpack.c.bf16 %v1349, %v1349
    %v1357 = vpack.c.bf16 %v1350, %v1350
    %v1358 = vpack.c.bf16 %v1351, %v1351
    %v1359 = vpack.c.bf16 %v1352, %v1352
    %s1360 = scalar_lea.vmem [#allocation13], 784
    %v1361 = vld [vmem:[%s1360] sm:$0xf]
    %v1362 = vld [vmem:[%s1360 + $0x4] sm:$0xf]
    %v1363 = vld [vmem:[%s1360 + $0x8] sm:$0xf]
    %v1364 = vld [vmem:[%s1360 + $0xc] sm:$0xf]
    %v1365 = vld [vmem:[%s1360 + $0x10] sm:$0xf]
    %v1366 = vld [vmem:[%s1360 + $0x14] sm:$0xf]
    %v1367 = vld [vmem:[%s1360 + $0x18] sm:$0xf]
    %v1368 = vld [vmem:[%s1360 + $0x1c] sm:$0xf]
    %v1369 = vld [vmem:[%s1360 + $0x20] sm:$0xf]
    %v1370 = vld [vmem:[%s1360 + $0x24] sm:$0xf]
    %v1371 = vld [vmem:[%s1360 + $0x28] sm:$0xf]
    %v1372 = vld [vmem:[%s1360 + $0x2c] sm:$0xf]
    %v1373 = vld [vmem:[%s1360 + $0x30] sm:$0xf]
    %v1374 = vld [vmem:[%s1360 + $0x34] sm:$0xf]
    %v1375 = vld [vmem:[%s1360 + $0x38] sm:$0xf]
    %v1376 = vld [vmem:[%s1360 + $0x3c] sm:$0xf]
    %v1377 = vld [vmem:[%s1360 + $0x40] sm:$0xf]
    %v1378 = vld [vmem:[%s1360 + $0x44] sm:$0xf]
    %v1379 = vld [vmem:[%s1360 + $0x48] sm:$0xf]
    %v1380 = vld [vmem:[%s1360 + $0x4c] sm:$0xf]
    %v1381 = vld [vmem:[%s1360 + $0x50] sm:$0xf]
    %v1382 = vld [vmem:[%s1360 + $0x54] sm:$0xf]
    %v1383 = vld [vmem:[%s1360 + $0x58] sm:$0xf]
    %v1384 = vld [vmem:[%s1360 + $0x5c] sm:$0xf]
    %v1385 = vld [vmem:[%s1360 + $0x60] sm:$0xf]
    %v1386 = vld [vmem:[%s1360 + $0x64] sm:$0xf]
    %v1387 = vld [vmem:[%s1360 + $0x68] sm:$0xf]
    %v1388 = vld [vmem:[%s1360 + $0x6c] sm:$0xf]
    %v1389 = vld [vmem:[%s1360 + $0x70] sm:$0xf]
    %v1390 = vld [vmem:[%s1360 + $0x74] sm:$0xf]
    %v1391 = vld [vmem:[%s1360 + $0x78] sm:$0xf]
    %v1392 = vld [vmem:[%s1360 + $0x7c] sm:$0xf]
    %v1393 = vld [vmem:[%s1360 + $0x80] sm:$0xf]
    %v1394 = vld [vmem:[%s1360 + $0x84] sm:$0xf]
    %v1395 = vld [vmem:[%s1360 + $0x88] sm:$0xf]
    %v1396 = vld [vmem:[%s1360 + $0x8c] sm:$0xf]
    %v1397 = vld [vmem:[%s1360 + $0x90] sm:$0xf]
    %v1398 = vld [vmem:[%s1360 + $0x94] sm:$0xf]
    %v1399 = vld [vmem:[%s1360 + $0x98] sm:$0xf]
    %v1400 = vld [vmem:[%s1360 + $0x9c] sm:$0xf]
    %v1401 = vld [vmem:[%s1360 + $0xa0] sm:$0xf]
    %v1402 = vld [vmem:[%s1360 + $0xa4] sm:$0xf]
    %v1403 = vld [vmem:[%s1360 + $0xa8] sm:$0xf]
    %v1404 = vld [vmem:[%s1360 + $0xac] sm:$0xf]
    %v1405 = vld [vmem:[%s1360 + $0xb0] sm:$0xf]
    %v1406 = vld [vmem:[%s1360 + $0xb4] sm:$0xf]
    %v1407 = vld [vmem:[%s1360 + $0xb8] sm:$0xf]
    %v1408 = vld [vmem:[%s1360 + $0xbc] sm:$0xf]
    %v1409 = vld [vmem:[%s1360 + $0xc0] sm:$0xf]
    %v1410 = vld [vmem:[%s1360 + $0xc4] sm:$0xf]
    %v1411 = vld [vmem:[%s1360 + $0xc8] sm:$0xf]
    %v1412 = vld [vmem:[%s1360 + $0xcc] sm:$0xf]
    %v1413 = vld [vmem:[%s1360 + $0xd0] sm:$0xf]
    %v1414 = vld [vmem:[%s1360 + $0xd4] sm:$0xf]
    %v1415 = vld [vmem:[%s1360 + $0xd8] sm:$0xf]
    %v1416 = vld [vmem:[%s1360 + $0xdc] sm:$0xf]
    %v1417 = vld [vmem:[%s1360 + $0xe0] sm:$0xf]
    %v1418 = vld [vmem:[%s1360 + $0xe4] sm:$0xf]
    %v1419 = vld [vmem:[%s1360 + $0xe8] sm:$0xf]
    %v1420 = vld [vmem:[%s1360 + $0xec] sm:$0xf]
    %v1421 = vld [vmem:[%s1360 + $0xf0] sm:$0xf]
    %v1422 = vld [vmem:[%s1360 + $0xf4] sm:$0xf]
    %v1423 = vld [vmem:[%s1360 + $0xf8] sm:$0xf]
    %v1424 = vld [vmem:[%s1360 + $0xfc] sm:$0xf]
    %v1425 = vld [vmem:[%s1360 + $0x100] sm:$0xf]
    %v1426 = vld [vmem:[%s1360 + $0x104] sm:$0xf]
    %v1427 = vld [vmem:[%s1360 + $0x108] sm:$0xf]
    %v1428 = vld [vmem:[%s1360 + $0x10c] sm:$0xf]
    %v1429 = vld [vmem:[%s1360 + $0x110] sm:$0xf]
    %v1430 = vld [vmem:[%s1360 + $0x114] sm:$0xf]
    %v1431 = vld [vmem:[%s1360 + $0x118] sm:$0xf]
    %v1432 = vld [vmem:[%s1360 + $0x11c] sm:$0xf]
    %v1433 = vld [vmem:[%s1360 + $0x120] sm:$0xf]
    %v1434 = vld [vmem:[%s1360 + $0x124] sm:$0xf]
    %v1435 = vld [vmem:[%s1360 + $0x128] sm:$0xf]
    %v1436 = vld [vmem:[%s1360 + $0x12c] sm:$0xf]
    %v1437 = vld [vmem:[%s1360 + $0x130] sm:$0xf]
    %v1438 = vld [vmem:[%s1360 + $0x134] sm:$0xf]
    %v1439 = vld [vmem:[%s1360 + $0x138] sm:$0xf]
    %v1440 = vld [vmem:[%s1360 + $0x13c] sm:$0xf]
    %v1441 = vld [vmem:[%s1360 + $0x140] sm:$0xf]
    %v1442 = vld [vmem:[%s1360 + $0x144] sm:$0xf]
    %v1443 = vld [vmem:[%s1360 + $0x148] sm:$0xf]
    %v1444 = vld [vmem:[%s1360 + $0x14c] sm:$0xf]
    %v1445 = vld [vmem:[%s1360 + $0x150] sm:$0xf]
    %v1446 = vld [vmem:[%s1360 + $0x154] sm:$0xf]
    %v1447 = vld [vmem:[%s1360 + $0x158] sm:$0xf]
    %v1448 = vld [vmem:[%s1360 + $0x15c] sm:$0xf]
    %v1449 = vld [vmem:[%s1360 + $0x160] sm:$0xf]
    %v1450 = vld [vmem:[%s1360 + $0x164] sm:$0xf]
    %v1451 = vld [vmem:[%s1360 + $0x168] sm:$0xf]
    %v1452 = vld [vmem:[%s1360 + $0x16c] sm:$0xf]
    %v1453 = vld [vmem:[%s1360 + $0x170] sm:$0xf]
    %v1454 = vld [vmem:[%s1360 + $0x174] sm:$0xf]
    %v1455 = vld [vmem:[%s1360 + $0x178] sm:$0xf]
    %v1456 = vld [vmem:[%s1360 + $0x17c] sm:$0xf]
    %v1457 = vld [vmem:[%s1360 + $0x180] sm:$0xf]
    %v1458 = vld [vmem:[%s1360 + $0x184] sm:$0xf]
    %v1557 = vunpack.c.l.b16 %v1361
    %v1558 = vunpack.c.l.b16 %v1362
    %v1559 = vunpack.c.l.b16 %v1363
    %v1560 = vunpack.c.l.b16 %v1364
    %v1561 = vunpack.c.l.b16 %v1365
    %v1562 = vunpack.c.l.b16 %v1366
    %v1563 = vunpack.c.l.b16 %v1367
    %v1564 = vunpack.c.l.b16 %v1368
    %v1565 = vunpack.c.l.b16 %v1369
    %v1566 = vunpack.c.l.b16 %v1370
    %v1567 = vunpack.c.l.b16 %v1371
    %v1568 = vunpack.c.l.b16 %v1372
    %v1569 = vunpack.c.l.b16 %v1373
    %v1570 = vunpack.c.l.b16 %v1374
    %v1571 = vunpack.c.l.b16 %v1375
    %v1572 = vunpack.c.l.b16 %v1376
    %v1573 = vunpack.c.l.b16 %v1377
    %v1574 = vunpack.c.l.b16 %v1378
    %v1575 = vunpack.c.l.b16 %v1379
    %v1576 = vunpack.c.l.b16 %v1380
    %v1577 = vunpack.c.l.b16 %v1381
    %v1578 = vunpack.c.l.b16 %v1382
    %v1579 = vunpack.c.l.b16 %v1383
    %v1580 = vunpack.c.l.b16 %v1384
    %v1581 = vunpack.c.l.b16 %v1385
    %v1582 = vunpack.c.l.b16 %v1386
    %v1583 = vunpack.c.l.b16 %v1387
    %v1584 = vunpack.c.l.b16 %v1388
    %v1585 = vunpack.c.l.b16 %v1389
    %v1586 = vunpack.c.l.b16 %v1390
    %v1587 = vunpack.c.l.b16 %v1391
    %v1588 = vunpack.c.l.b16 %v1392
    %v1589 = vunpack.c.l.b16 %v1393
    %v1590 = vunpack.c.l.b16 %v1394
    %v1591 = vunpack.c.l.b16 %v1395
    %v1592 = vunpack.c.l.b16 %v1396
    %v1593 = vunpack.c.l.b16 %v1397
    %v1594 = vunpack.c.l.b16 %v1398
    %v1595 = vunpack.c.l.b16 %v1399
    %v1596 = vunpack.c.l.b16 %v1400
    %v1597 = vunpack.c.l.b16 %v1401
    %v1598 = vunpack.c.l.b16 %v1402
    %v1599 = vunpack.c.l.b16 %v1403
    %v1600 = vunpack.c.l.b16 %v1404
    %v1601 = vunpack.c.l.b16 %v1405
    %v1602 = vunpack.c.l.b16 %v1406
    %v1603 = vunpack.c.l.b16 %v1407
    %v1604 = vunpack.c.l.b16 %v1408
    %v1605 = vunpack.c.l.b16 %v1409
    %v1606 = vunpack.c.l.b16 %v1410
    %v1607 = vunpack.c.l.b16 %v1411
    %v1608 = vunpack.c.l.b16 %v1412
    %v1609 = vunpack.c.l.b16 %v1413
    %v1610 = vunpack.c.l.b16 %v1414
    %v1611 = vunpack.c.l.b16 %v1415
    %v1612 = vunpack.c.l.b16 %v1416
    %v1613 = vunpack.c.l.b16 %v1417
    %v1614 = vunpack.c.l.b16 %v1418
    %v1615 = vunpack.c.l.b16 %v1419
    %v1616 = vunpack.c.l.b16 %v1420
    %v1617 = vunpack.c.l.b16 %v1421
    %v1618 = vunpack.c.l.b16 %v1422
    %v1619 = vunpack.c.l.b16 %v1423
    %v1620 = vunpack.c.l.b16 %v1424
    %v1621 = vunpack.c.l.b16 %v1425
    %v1622 = vunpack.c.l.b16 %v1426
    %v1623 = vunpack.c.l.b16 %v1427
    %v1624 = vunpack.c.l.b16 %v1428
    %v1625 = vunpack.c.l.b16 %v1429
    %v1626 = vunpack.c.l.b16 %v1430
    %v1627 = vunpack.c.l.b16 %v1431
    %v1628 = vunpack.c.l.b16 %v1432
    %v1629 = vunpack.c.l.b16 %v1433
    %v1630 = vunpack.c.l.b16 %v1434
    %v1631 = vunpack.c.l.b16 %v1435
    %v1632 = vunpack.c.l.b16 %v1436
    %v1633 = vunpack.c.l.b16 %v1437
    %v1634 = vunpack.c.l.b16 %v1438
    %v1635 = vunpack.c.l.b16 %v1439
    %v1636 = vunpack.c.l.b16 %v1440
    %v1637 = vunpack.c.l.b16 %v1441
    %v1638 = vunpack.c.l.b16 %v1442
    %v1639 = vunpack.c.l.b16 %v1443
    %v1640 = vunpack.c.l.b16 %v1444
    %v1641 = vunpack.c.l.b16 %v1445
    %v1642 = vunpack.c.l.b16 %v1446
    %v1643 = vunpack.c.l.b16 %v1447
    %v1644 = vunpack.c.l.b16 %v1448
    %v1645 = vunpack.c.l.b16 %v1449
    %v1646 = vunpack.c.l.b16 %v1450
    %v1647 = vunpack.c.l.b16 %v1451
    %v1648 = vunpack.c.l.b16 %v1452
    %v1649 = vunpack.c.l.b16 %v1453
    %v1650 = vunpack.c.l.b16 %v1454
    %v1651 = vunpack.c.l.b16 %v1455
    %v1652 = vunpack.c.l.b16 %v1456
    %v1653 = vunpack.c.l.b16 %v1457
    %v1654 = vunpack.c.l.b16 %v1458
    %v1655 = vpack.c.b16 %v1558, %v1557
    %v1656 = vpack.c.b16 %v1560, %v1559
    %v1657 = vpack.c.b16 %v1562, %v1561
    %v1658 = vpack.c.b16 %v1564, %v1563
    %v1659 = vpack.c.b16 %v1566, %v1565
    %v1660 = vpack.c.b16 %v1568, %v1567
    %v1661 = vpack.c.b16 %v1570, %v1569
    %v1662 = vpack.c.b16 %v1572, %v1571
    %v1663 = vpack.c.b16 %v1574, %v1573
    %v1664 = vpack.c.b16 %v1576, %v1575
    %v1665 = vpack.c.b16 %v1578, %v1577
    %v1666 = vpack.c.b16 %v1580, %v1579
    %v1667 = vpack.c.b16 %v1582, %v1581
    %v1668 = vpack.c.b16 %v1584, %v1583
    %v1669 = vpack.c.b16 %v1586, %v1585
    %v1670 = vpack.c.b16 %v1588, %v1587
    %v1671 = vpack.c.b16 %v1590, %v1589
    %v1672 = vpack.c.b16 %v1592, %v1591
    %v1673 = vpack.c.b16 %v1594, %v1593
    %v1674 = vpack.c.b16 %v1596, %v1595
    %v1675 = vpack.c.b16 %v1598, %v1597
    %v1676 = vpack.c.b16 %v1600, %v1599
    %v1677 = vpack.c.b16 %v1602, %v1601
    %v1678 = vpack.c.b16 %v1604, %v1603
    %v1679 = vpack.c.b16 %v1606, %v1605
    %v1680 = vpack.c.b16 %v1608, %v1607
    %v1681 = vpack.c.b16 %v1610, %v1609
    %v1682 = vpack.c.b16 %v1612, %v1611
    %v1683 = vpack.c.b16 %v1614, %v1613
    %v1684 = vpack.c.b16 %v1616, %v1615
    %v1685 = vpack.c.b16 %v1618, %v1617
    %v1686 = vpack.c.b16 %v1620, %v1619
    %v1687 = vpack.c.b16 %v1622, %v1621
    %v1688 = vpack.c.b16 %v1624, %v1623
    %v1689 = vpack.c.b16 %v1626, %v1625
    %v1690 = vpack.c.b16 %v1628, %v1627
    %v1691 = vpack.c.b16 %v1630, %v1629
    %v1692 = vpack.c.b16 %v1632, %v1631
    %v1693 = vpack.c.b16 %v1634, %v1633
    %v1694 = vpack.c.b16 %v1636, %v1635
    %v1695 = vpack.c.b16 %v1638, %v1637
    %v1696 = vpack.c.b16 %v1640, %v1639
    %v1697 = vpack.c.b16 %v1642, %v1641
    %v1698 = vpack.c.b16 %v1644, %v1643
    %v1699 = vpack.c.b16 %v1646, %v1645
    %v1700 = vpack.c.b16 %v1648, %v1647
    %v1701 = vpack.c.b16 %v1650, %v1649
    %v1702 = vpack.c.b16 %v1652, %v1651
    %v1703 = vpack.c.b16 %v1654, %v1653
    %v1754 = vsel %vm817, %v1359, 0
    %1756 = vmatpush.bf16.msra.mxu0 %v1662
    %1757 = vmatpush.bf16.msra.mxu0 %v1661
    %1758 = vmatpush.bf16.msra.mxu0 %v1660
    %1759 = vmatpush.bf16.msra.mxu0 %v1659
    %1760 = vmatpush.bf16.msra.mxu0 %v1658
    %1761 = vmatpush.bf16.msra.mxu0 %v1657
    %1762 = vmatpush.bf16.msra.mxu0 %v1656
    %1763 = vmatpush.bf16.msra.mxu0 %v1655
    %1764 = vmatmul.bf16.gmra.mxu0 %v1353
    %v1765 = vpop.f32.mrf.mxu0
    %v1766 = vadd.f32 0.0, %v1765
    %v1767 = vpop.f32.mrf.mxu0
    %1768 = vdwg.mxu0
    %1769 = vmatpush.bf16.msra.mxu0 %v1670
    %1770 = vmatpush.bf16.msra.mxu0 %v1669
    %1771 = vmatpush.bf16.msra.mxu0 %v1668
    %1772 = vmatpush.bf16.msra.mxu0 %v1667
    %1773 = vmatpush.bf16.msra.mxu0 %v1666
    %1774 = vmatpush.bf16.msra.mxu0 %v1665
    %1775 = vmatpush.bf16.msra.mxu0 %v1664
    %1776 = vmatpush.bf16.msra.mxu0 %v1663
    %1777 = vmatmul.bf16.gmra.mxu0 %v1354
    %v1778 = vpop.f32.mrf.mxu0
    %v1779 = vadd.f32 %v1766, %v1778
    %v1780 = vpop.f32.mrf.mxu0
    %1781 = vdwg.mxu0
    %1782 = vmatpush.bf16.msra.mxu0 %v1678
    %1783 = vmatpush.bf16.msra.mxu0 %v1677
    %1784 = vmatpush.bf16.msra.mxu0 %v1676
    %1785 = vmatpush.bf16.msra.mxu0 %v1675
    %1786 = vmatpush.bf16.msra.mxu0 %v1674
    %1787 = vmatpush.bf16.msra.mxu0 %v1673
    %1788 = vmatpush.bf16.msra.mxu0 %v1672
    %1789 = vmatpush.bf16.msra.mxu0 %v1671
    %1790 = vmatmul.bf16.gmra.mxu0 %v1355
    %v1791 = vpop.f32.mrf.mxu0
    %v1792 = vadd.f32 %v1779, %v1791
    %v1793 = vpop.f32.mrf.mxu0
    %1794 = vdwg.mxu0
    %1795 = vmatpush.bf16.msra.mxu0 %v1686
    %1796 = vmatpush.bf16.msra.mxu0 %v1685
    %1797 = vmatpush.bf16.msra.mxu0 %v1684
    %1798 = vmatpush.bf16.msra.mxu0 %v1683
    %1799 = vmatpush.bf16.msra.mxu0 %v1682
    %1800 = vmatpush.bf16.msra.mxu0 %v1681
    %1801 = vmatpush.bf16.msra.mxu0 %v1680
    %1802 = vmatpush.bf16.msra.mxu0 %v1679
    %1803 = vmatmul.bf16.gmra.mxu0 %v1356
    %v1804 = vpop.f32.mrf.mxu0
    %v1805 = vadd.f32 %v1792, %v1804
    %v1806 = vpop.f32.mrf.mxu0
    %1807 = vdwg.mxu0
    %1808 = vmatpush.bf16.msra.mxu0 %v1694
    %1809 = vmatpush.bf16.msra.mxu0 %v1693
    %1810 = vmatpush.bf16.msra.mxu0 %v1692
    %1811 = vmatpush.bf16.msra.mxu0 %v1691
    %1812 = vmatpush.bf16.msra.mxu0 %v1690
    %1813 = vmatpush.bf16.msra.mxu0 %v1689
    %1814 = vmatpush.bf16.msra.mxu0 %v1688
    %1815 = vmatpush.bf16.msra.mxu0 %v1687
    %1816 = vmatmul.bf16.gmra.mxu0 %v1357
    %v1817 = vpop.f32.mrf.mxu0
    %v1818 = vadd.f32 %v1805, %v1817
    %v1819 = vpop.f32.mrf.mxu0
    %1820 = vdwg.mxu0
    %1821 = vmatpush.bf16.msra.mxu0 %v1702
    %1822 = vmatpush.bf16.msra.mxu0 %v1701
    %1823 = vmatpush.bf16.msra.mxu0 %v1700
    %1824 = vmatpush.bf16.msra.mxu0 %v1699
    %1825 = vmatpush.bf16.msra.mxu0 %v1698
    %1826 = vmatpush.bf16.msra.mxu0 %v1697
    %1827 = vmatpush.bf16.msra.mxu0 %v1696
    %1828 = vmatpush.bf16.msra.mxu0 %v1695
    %1829 = vmatmul.bf16.gmra.mxu0 %v1358
    %v1830 = vpop.f32.mrf.mxu0
    %v1831 = vadd.f32 %v1818, %v1830
    %v1832 = vpop.f32.mrf.mxu0
    %1833 = vdwg.mxu0
    %1834 = vmatpush.bf16.msra.mxu0 0
    %1835 = vmatpush.bf16.msra.mxu0 0
    %1836 = vmatpush.bf16.msra.mxu0 0
    %1837 = vmatpush.bf16.msra.mxu0 0
    %1838 = vmatpush.bf16.msra.mxu0 0
    %1839 = vmatpush.bf16.msra.mxu0 0
    %1840 = vmatpush.bf16.msra.mxu0 0
    %1841 = vmatpush.bf16.msra.mxu0 %v1703
    %1842 = vmatmul.bf16.gmra.mxu0 %v1754
    %v1843 = vpop.f32.mrf.mxu0
    %v1844 = vadd.f32 %v1831, %v1843
    %v1845 = vpop.f32.mrf.mxu0
    %1846 = vdwg.mxu0
    %v1847 = vadd.f32 %v1297, %v1844
    %v1848 = vstv %s126
    %v1849 = vmul.f32 %v153, %v1848
    %v1850 = vmul.f32 %v154, %v1848
    %v1851 = vmul.f32 %v155, %v1848
    %v1852 = vmul.f32 %v156, %v1848
    %v1853 = vmul.f32 %v157, %v1848
    %v1854 = vmul.f32 %v158, %v1848
    %v1855 = vmul.f32 %v159, %v1848
    %v1856 = vstv %s127
    %v1857 = vmul.f32 %v176, %v1856
    %v1858 = vmul.f32 %v177, %v1856
    %v1859 = vmul.f32 %v178, %v1856
    %v1860 = vmul.f32 %v179, %v1856
    %v1861 = vmul.f32 %v180, %v1856
    %v1862 = vmul.f32 %v181, %v1856
    %v1863 = vmul.f32 %v182, %v1856
    %v1864 = vadd.f32 %v1849, %v1857
    %v1865 = vadd.f32 %v1850, %v1858
    %v1866 = vadd.f32 %v1851, %v1859
    %v1867 = vadd.f32 %v1852, %v1860
    %v1868 = vadd.f32 %v1853, %v1861
    %v1869 = vadd.f32 %v1854, %v1862
    %v1870 = vadd.f32 %v1855, %v1863
    %v1871 = vstv %s128
    %v1872 = vmul.f32 %v199, %v1871
    %v1873 = vmul.f32 %v200, %v1871
    %v1874 = vmul.f32 %v201, %v1871
    %v1875 = vmul.f32 %v202, %v1871
    %v1876 = vmul.f32 %v203, %v1871
    %v1877 = vmul.f32 %v204, %v1871
    %v1878 = vmul.f32 %v205, %v1871
    %v1879 = vadd.f32 %v1864, %v1872
    %v1880 = vadd.f32 %v1865, %v1873
    %v1881 = vadd.f32 %v1866, %v1874
    %v1882 = vadd.f32 %v1867, %v1875
    %v1883 = vadd.f32 %v1868, %v1876
    %v1884 = vadd.f32 %v1869, %v1877
    %v1885 = vadd.f32 %v1870, %v1878
    %v1886 = vstv %s135
    %v1887 = vadd.f32 %v1879, %v1886
    %v1888 = vadd.f32 %v1880, %v1886
    %v1889 = vadd.f32 %v1881, %v1886
    %v1890 = vadd.f32 %v1882, %v1886
    %v1891 = vadd.f32 %v1883, %v1886
    %v1892 = vadd.f32 %v1884, %v1886
    %v1893 = vadd.f32 %v1885, %v1886
    %v1894 = vmax.f32 %v1887, 0.0
    %v1895 = vmax.f32 %v1888, 0.0
    %v1896 = vmax.f32 %v1889, 0.0
    %v1897 = vmax.f32 %v1890, 0.0
    %v1898 = vmax.f32 %v1891, 0.0
    %v1899 = vmax.f32 %v1892, 0.0
    %v1900 = vmax.f32 %v1893, 0.0
    %v1901 = vpack.c.bf16 %v1894, %v1894
    %v1902 = vpack.c.bf16 %v1895, %v1895
    %v1903 = vpack.c.bf16 %v1896, %v1896
    %v1904 = vpack.c.bf16 %v1897, %v1897
    %v1905 = vpack.c.bf16 %v1898, %v1898
    %v1906 = vpack.c.bf16 %v1899, %v1899
    %v1907 = vpack.c.bf16 %v1900, %v1900
    %s1908 = scalar_lea.vmem [#allocation13], 1176
    %v1909 = vld [vmem:[%s1908] sm:$0xf]
    %v1910 = vld [vmem:[%s1908 + $0x4] sm:$0xf]
    %v1911 = vld [vmem:[%s1908 + $0x8] sm:$0xf]
    %v1912 = vld [vmem:[%s1908 + $0xc] sm:$0xf]
    %v1913 = vld [vmem:[%s1908 + $0x10] sm:$0xf]
    %v1914 = vld [vmem:[%s1908 + $0x14] sm:$0xf]
    %v1915 = vld [vmem:[%s1908 + $0x18] sm:$0xf]
    %v1916 = vld [vmem:[%s1908 + $0x1c] sm:$0xf]
    %v1917 = vld [vmem:[%s1908 + $0x20] sm:$0xf]
    %v1918 = vld [vmem:[%s1908 + $0x24] sm:$0xf]
    %v1919 = vld [vmem:[%s1908 + $0x28] sm:$0xf]
    %v1920 = vld [vmem:[%s1908 + $0x2c] sm:$0xf]
    %v1921 = vld [vmem:[%s1908 + $0x30] sm:$0xf]
    %v1922 = vld [vmem:[%s1908 + $0x34] sm:$0xf]
    %v1923 = vld [vmem:[%s1908 + $0x38] sm:$0xf]
    %v1924 = vld [vmem:[%s1908 + $0x3c] sm:$0xf]
    %v1925 = vld [vmem:[%s1908 + $0x40] sm:$0xf]
    %v1926 = vld [vmem:[%s1908 + $0x44] sm:$0xf]
    %v1927 = vld [vmem:[%s1908 + $0x48] sm:$0xf]
    %v1928 = vld [vmem:[%s1908 + $0x4c] sm:$0xf]
    %v1929 = vld [vmem:[%s1908 + $0x50] sm:$0xf]
    %v1930 = vld [vmem:[%s1908 + $0x54] sm:$0xf]
    %v1931 = vld [vmem:[%s1908 + $0x58] sm:$0xf]
    %v1932 = vld [vmem:[%s1908 + $0x5c] sm:$0xf]
    %v1933 = vld [vmem:[%s1908 + $0x60] sm:$0xf]
    %v1934 = vld [vmem:[%s1908 + $0x64] sm:$0xf]
    %v1935 = vld [vmem:[%s1908 + $0x68] sm:$0xf]
    %v1936 = vld [vmem:[%s1908 + $0x6c] sm:$0xf]
    %v1937 = vld [vmem:[%s1908 + $0x70] sm:$0xf]
    %v1938 = vld [vmem:[%s1908 + $0x74] sm:$0xf]
    %v1939 = vld [vmem:[%s1908 + $0x78] sm:$0xf]
    %v1940 = vld [vmem:[%s1908 + $0x7c] sm:$0xf]
    %v1941 = vld [vmem:[%s1908 + $0x80] sm:$0xf]
    %v1942 = vld [vmem:[%s1908 + $0x84] sm:$0xf]
    %v1943 = vld [vmem:[%s1908 + $0x88] sm:$0xf]
    %v1944 = vld [vmem:[%s1908 + $0x8c] sm:$0xf]
    %v1945 = vld [vmem:[%s1908 + $0x90] sm:$0xf]
    %v1946 = vld [vmem:[%s1908 + $0x94] sm:$0xf]
    %v1947 = vld [vmem:[%s1908 + $0x98] sm:$0xf]
    %v1948 = vld [vmem:[%s1908 + $0x9c] sm:$0xf]
    %v1949 = vld [vmem:[%s1908 + $0xa0] sm:$0xf]
    %v1950 = vld [vmem:[%s1908 + $0xa4] sm:$0xf]
    %v1951 = vld [vmem:[%s1908 + $0xa8] sm:$0xf]
    %v1952 = vld [vmem:[%s1908 + $0xac] sm:$0xf]
    %v1953 = vld [vmem:[%s1908 + $0xb0] sm:$0xf]
    %v1954 = vld [vmem:[%s1908 + $0xb4] sm:$0xf]
    %v1955 = vld [vmem:[%s1908 + $0xb8] sm:$0xf]
    %v1956 = vld [vmem:[%s1908 + $0xbc] sm:$0xf]
    %v1957 = vld [vmem:[%s1908 + $0xc0] sm:$0xf]
    %v1958 = vld [vmem:[%s1908 + $0xc4] sm:$0xf]
    %v1959 = vld [vmem:[%s1908 + $0xc8] sm:$0xf]
    %v1960 = vld [vmem:[%s1908 + $0xcc] sm:$0xf]
    %v1961 = vld [vmem:[%s1908 + $0xd0] sm:$0xf]
    %v1962 = vld [vmem:[%s1908 + $0xd4] sm:$0xf]
    %v1963 = vld [vmem:[%s1908 + $0xd8] sm:$0xf]
    %v1964 = vld [vmem:[%s1908 + $0xdc] sm:$0xf]
    %v1965 = vld [vmem:[%s1908 + $0xe0] sm:$0xf]
    %v1966 = vld [vmem:[%s1908 + $0xe4] sm:$0xf]
    %v1967 = vld [vmem:[%s1908 + $0xe8] sm:$0xf]
    %v1968 = vld [vmem:[%s1908 + $0xec] sm:$0xf]
    %v1969 = vld [vmem:[%s1908 + $0xf0] sm:$0xf]
    %v1970 = vld [vmem:[%s1908 + $0xf4] sm:$0xf]
    %v1971 = vld [vmem:[%s1908 + $0xf8] sm:$0xf]
    %v1972 = vld [vmem:[%s1908 + $0xfc] sm:$0xf]
    %v1973 = vld [vmem:[%s1908 + $0x100] sm:$0xf]
    %v1974 = vld [vmem:[%s1908 + $0x104] sm:$0xf]
    %v1975 = vld [vmem:[%s1908 + $0x108] sm:$0xf]
    %v1976 = vld [vmem:[%s1908 + $0x10c] sm:$0xf]
    %v1977 = vld [vmem:[%s1908 + $0x110] sm:$0xf]
    %v1978 = vld [vmem:[%s1908 + $0x114] sm:$0xf]
    %v1979 = vld [vmem:[%s1908 + $0x118] sm:$0xf]
    %v1980 = vld [vmem:[%s1908 + $0x11c] sm:$0xf]
    %v1981 = vld [vmem:[%s1908 + $0x120] sm:$0xf]
    %v1982 = vld [vmem:[%s1908 + $0x124] sm:$0xf]
    %v1983 = vld [vmem:[%s1908 + $0x128] sm:$0xf]
    %v1984 = vld [vmem:[%s1908 + $0x12c] sm:$0xf]
    %v1985 = vld [vmem:[%s1908 + $0x130] sm:$0xf]
    %v1986 = vld [vmem:[%s1908 + $0x134] sm:$0xf]
    %v1987 = vld [vmem:[%s1908 + $0x138] sm:$0xf]
    %v1988 = vld [vmem:[%s1908 + $0x13c] sm:$0xf]
    %v1989 = vld [vmem:[%s1908 + $0x140] sm:$0xf]
    %v1990 = vld [vmem:[%s1908 + $0x144] sm:$0xf]
    %v1991 = vld [vmem:[%s1908 + $0x148] sm:$0xf]
    %v1992 = vld [vmem:[%s1908 + $0x14c] sm:$0xf]
    %v1993 = vld [vmem:[%s1908 + $0x150] sm:$0xf]
    %v1994 = vld [vmem:[%s1908 + $0x154] sm:$0xf]
    %v1995 = vld [vmem:[%s1908 + $0x158] sm:$0xf]
    %v1996 = vld [vmem:[%s1908 + $0x15c] sm:$0xf]
    %v1997 = vld [vmem:[%s1908 + $0x160] sm:$0xf]
    %v1998 = vld [vmem:[%s1908 + $0x164] sm:$0xf]
    %v1999 = vld [vmem:[%s1908 + $0x168] sm:$0xf]
    %v2000 = vld [vmem:[%s1908 + $0x16c] sm:$0xf]
    %v2001 = vld [vmem:[%s1908 + $0x170] sm:$0xf]
    %v2002 = vld [vmem:[%s1908 + $0x174] sm:$0xf]
    %v2003 = vld [vmem:[%s1908 + $0x178] sm:$0xf]
    %v2004 = vld [vmem:[%s1908 + $0x17c] sm:$0xf]
    %v2005 = vld [vmem:[%s1908 + $0x180] sm:$0xf]
    %v2006 = vld [vmem:[%s1908 + $0x184] sm:$0xf]
    %v2105 = vunpack.c.l.b16 %v1909
    %v2106 = vunpack.c.l.b16 %v1910
    %v2107 = vunpack.c.l.b16 %v1911
    %v2108 = vunpack.c.l.b16 %v1912
    %v2109 = vunpack.c.l.b16 %v1913
    %v2110 = vunpack.c.l.b16 %v1914
    %v2111 = vunpack.c.l.b16 %v1915
    %v2112 = vunpack.c.l.b16 %v1916
    %v2113 = vunpack.c.l.b16 %v1917
    %v2114 = vunpack.c.l.b16 %v1918
    %v2115 = vunpack.c.l.b16 %v1919
    %v2116 = vunpack.c.l.b16 %v1920
    %v2117 = vunpack.c.l.b16 %v1921
    %v2118 = vunpack.c.l.b16 %v1922
    %v2119 = vunpack.c.l.b16 %v1923
    %v2120 = vunpack.c.l.b16 %v1924
    %v2121 = vunpack.c.l.b16 %v1925
    %v2122 = vunpack.c.l.b16 %v1926
    %v2123 = vunpack.c.l.b16 %v1927
    %v2124 = vunpack.c.l.b16 %v1928
    %v2125 = vunpack.c.l.b16 %v1929
    %v2126 = vunpack.c.l.b16 %v1930
    %v2127 = vunpack.c.l.b16 %v1931
    %v2128 = vunpack.c.l.b16 %v1932
    %v2129 = vunpack.c.l.b16 %v1933
    %v2130 = vunpack.c.l.b16 %v1934
    %v2131 = vunpack.c.l.b16 %v1935
    %v2132 = vunpack.c.l.b16 %v1936
    %v2133 = vunpack.c.l.b16 %v1937
    %v2134 = vunpack.c.l.b16 %v1938
    %v2135 = vunpack.c.l.b16 %v1939
    %v2136 = vunpack.c.l.b16 %v1940
    %v2137 = vunpack.c.l.b16 %v1941
    %v2138 = vunpack.c.l.b16 %v1942
    %v2139 = vunpack.c.l.b16 %v1943
    %v2140 = vunpack.c.l.b16 %v1944
    %v2141 = vunpack.c.l.b16 %v1945
    %v2142 = vunpack.c.l.b16 %v1946
    %v2143 = vunpack.c.l.b16 %v1947
    %v2144 = vunpack.c.l.b16 %v1948
    %v2145 = vunpack.c.l.b16 %v1949
    %v2146 = vunpack.c.l.b16 %v1950
    %v2147 = vunpack.c.l.b16 %v1951
    %v2148 = vunpack.c.l.b16 %v1952
    %v2149 = vunpack.c.l.b16 %v1953
    %v2150 = vunpack.c.l.b16 %v1954
    %v2151 = vunpack.c.l.b16 %v1955
    %v2152 = vunpack.c.l.b16 %v1956
    %v2153 = vunpack.c.l.b16 %v1957
    %v2154 = vunpack.c.l.b16 %v1958
    %v2155 = vunpack.c.l.b16 %v1959
    %v2156 = vunpack.c.l.b16 %v1960
    %v2157 = vunpack.c.l.b16 %v1961
    %v2158 = vunpack.c.l.b16 %v1962
    %v2159 = vunpack.c.l.b16 %v1963
    %v2160 = vunpack.c.l.b16 %v1964
    %v2161 = vunpack.c.l.b16 %v1965
    %v2162 = vunpack.c.l.b16 %v1966
    %v2163 = vunpack.c.l.b16 %v1967
    %v2164 = vunpack.c.l.b16 %v1968
    %v2165 = vunpack.c.l.b16 %v1969
    %v2166 = vunpack.c.l.b16 %v1970
    %v2167 = vunpack.c.l.b16 %v1971
    %v2168 = vunpack.c.l.b16 %v1972
    %v2169 = vunpack.c.l.b16 %v1973
    %v2170 = vunpack.c.l.b16 %v1974
    %v2171 = vunpack.c.l.b16 %v1975
    %v2172 = vunpack.c.l.b16 %v1976
    %v2173 = vunpack.c.l.b16 %v1977
    %v2174 = vunpack.c.l.b16 %v1978
    %v2175 = vunpack.c.l.b16 %v1979
    %v2176 = vunpack.c.l.b16 %v1980
    %v2177 = vunpack.c.l.b16 %v1981
    %v2178 = vunpack.c.l.b16 %v1982
    %v2179 = vunpack.c.l.b16 %v1983
    %v2180 = vunpack.c.l.b16 %v1984
    %v2181 = vunpack.c.l.b16 %v1985
    %v2182 = vunpack.c.l.b16 %v1986
    %v2183 = vunpack.c.l.b16 %v1987
    %v2184 = vunpack.c.l.b16 %v1988
    %v2185 = vunpack.c.l.b16 %v1989
    %v2186 = vunpack.c.l.b16 %v1990
    %v2187 = vunpack.c.l.b16 %v1991
    %v2188 = vunpack.c.l.b16 %v1992
    %v2189 = vunpack.c.l.b16 %v1993
    %v2190 = vunpack.c.l.b16 %v1994
    %v2191 = vunpack.c.l.b16 %v1995
    %v2192 = vunpack.c.l.b16 %v1996
    %v2193 = vunpack.c.l.b16 %v1997
    %v2194 = vunpack.c.l.b16 %v1998
    %v2195 = vunpack.c.l.b16 %v1999
    %v2196 = vunpack.c.l.b16 %v2000
    %v2197 = vunpack.c.l.b16 %v2001
    %v2198 = vunpack.c.l.b16 %v2002
    %v2199 = vunpack.c.l.b16 %v2003
    %v2200 = vunpack.c.l.b16 %v2004
    %v2201 = vunpack.c.l.b16 %v2005
    %v2202 = vunpack.c.l.b16 %v2006
    %v2203 = vpack.c.b16 %v2106, %v2105
    %v2204 = vpack.c.b16 %v2108, %v2107
    %v2205 = vpack.c.b16 %v2110, %v2109
    %v2206 = vpack.c.b16 %v2112, %v2111
    %v2207 = vpack.c.b16 %v2114, %v2113
    %v2208 = vpack.c.b16 %v2116, %v2115
    %v2209 = vpack.c.b16 %v2118, %v2117
    %v2210 = vpack.c.b16 %v2120, %v2119
    %v2211 = vpack.c.b16 %v2122, %v2121
    %v2212 = vpack.c.b16 %v2124, %v2123
    %v2213 = vpack.c.b16 %v2126, %v2125
    %v2214 = vpack.c.b16 %v2128, %v2127
    %v2215 = vpack.c.b16 %v2130, %v2129
    %v2216 = vpack.c.b16 %v2132, %v2131
    %v2217 = vpack.c.b16 %v2134, %v2133
    %v2218 = vpack.c.b16 %v2136, %v2135
    %v2219 = vpack.c.b16 %v2138, %v2137
    %v2220 = vpack.c.b16 %v2140, %v2139
    %v2221 = vpack.c.b16 %v2142, %v2141
    %v2222 = vpack.c.b16 %v2144, %v2143
    %v2223 = vpack.c.b16 %v2146, %v2145
    %v2224 = vpack.c.b16 %v2148, %v2147
    %v2225 = vpack.c.b16 %v2150, %v2149
    %v2226 = vpack.c.b16 %v2152, %v2151
    %v2227 = vpack.c.b16 %v2154, %v2153
    %v2228 = vpack.c.b16 %v2156, %v2155
    %v2229 = vpack.c.b16 %v2158, %v2157
    %v2230 = vpack.c.b16 %v2160, %v2159
    %v2231 = vpack.c.b16 %v2162, %v2161
    %v2232 = vpack.c.b16 %v2164, %v2163
    %v2233 = vpack.c.b16 %v2166, %v2165
    %v2234 = vpack.c.b16 %v2168, %v2167
    %v2235 = vpack.c.b16 %v2170, %v2169
    %v2236 = vpack.c.b16 %v2172, %v2171
    %v2237 = vpack.c.b16 %v2174, %v2173
    %v2238 = vpack.c.b16 %v2176, %v2175
    %v2239 = vpack.c.b16 %v2178, %v2177
    %v2240 = vpack.c.b16 %v2180, %v2179
    %v2241 = vpack.c.b16 %v2182, %v2181
    %v2242 = vpack.c.b16 %v2184, %v2183
    %v2243 = vpack.c.b16 %v2186, %v2185
    %v2244 = vpack.c.b16 %v2188, %v2187
    %v2245 = vpack.c.b16 %v2190, %v2189
    %v2246 = vpack.c.b16 %v2192, %v2191
    %v2247 = vpack.c.b16 %v2194, %v2193
    %v2248 = vpack.c.b16 %v2196, %v2195
    %v2249 = vpack.c.b16 %v2198, %v2197
    %v2250 = vpack.c.b16 %v2200, %v2199
    %v2251 = vpack.c.b16 %v2202, %v2201
    %v2302 = vsel %vm817, %v1907, 0
    %2304 = vmatpush.bf16.msra.mxu0 %v2210
    %2305 = vmatpush.bf16.msra.mxu0 %v2209
    %2306 = vmatpush.bf16.msra.mxu0 %v2208
    %2307 = vmatpush.bf16.msra.mxu0 %v2207
    %2308 = vmatpush.bf16.msra.mxu0 %v2206
    %2309 = vmatpush.bf16.msra.mxu0 %v2205
    %2310 = vmatpush.bf16.msra.mxu0 %v2204
    %2311 = vmatpush.bf16.msra.mxu0 %v2203
    %2312 = vmatmul.bf16.gmra.mxu0 %v1901
    %v2313 = vpop.f32.mrf.mxu0
    %v2314 = vadd.f32 0.0, %v2313
    %v2315 = vpop.f32.mrf.mxu0
    %2316 = vdwg.mxu0
    %2317 = vmatpush.bf16.msra.mxu0 %v2218
    %2318 = vmatpush.bf16.msra.mxu0 %v2217
    %2319 = vmatpush.bf16.msra.mxu0 %v2216
    %2320 = vmatpush.bf16.msra.mxu0 %v2215
    %2321 = vmatpush.bf16.msra.mxu0 %v2214
    %2322 = vmatpush.bf16.msra.mxu0 %v2213
    %2323 = vmatpush.bf16.msra.mxu0 %v2212
    %2324 = vmatpush.bf16.msra.mxu0 %v2211
    %2325 = vmatmul.bf16.gmra.mxu0 %v1902
    %v2326 = vpop.f32.mrf.mxu0
    %v2327 = vadd.f32 %v2314, %v2326
    %v2328 = vpop.f32.mrf.mxu0
    %2329 = vdwg.mxu0
    %2330 = vmatpush.bf16.msra.mxu0 %v2226
    %2331 = vmatpush.bf16.msra.mxu0 %v2225
    %2332 = vmatpush.bf16.msra.mxu0 %v2224
    %2333 = vmatpush.bf16.msra.mxu0 %v2223
    %2334 = vmatpush.bf16.msra.mxu0 %v2222
    %2335 = vmatpush.bf16.msra.mxu0 %v2221
    %2336 = vmatpush.bf16.msra.mxu0 %v2220
    %2337 = vmatpush.bf16.msra.mxu0 %v2219
    %2338 = vmatmul.bf16.gmra.mxu0 %v1903
    %v2339 = vpop.f32.mrf.mxu0
    %v2340 = vadd.f32 %v2327, %v2339
    %v2341 = vpop.f32.mrf.mxu0
    %2342 = vdwg.mxu0
    %2343 = vmatpush.bf16.msra.mxu0 %v2234
    %2344 = vmatpush.bf16.msra.mxu0 %v2233
    %2345 = vmatpush.bf16.msra.mxu0 %v2232
    %2346 = vmatpush.bf16.msra.mxu0 %v2231
    %2347 = vmatpush.bf16.msra.mxu0 %v2230
    %2348 = vmatpush.bf16.msra.mxu0 %v2229
    %2349 = vmatpush.bf16.msra.mxu0 %v2228
    %2350 = vmatpush.bf16.msra.mxu0 %v2227
    %2351 = vmatmul.bf16.gmra.mxu0 %v1904
    %v2352 = vpop.f32.mrf.mxu0
    %v2353 = vadd.f32 %v2340, %v2352
    %v2354 = vpop.f32.mrf.mxu0
    %2355 = vdwg.mxu0
    %2356 = vmatpush.bf16.msra.mxu0 %v2242
    %2357 = vmatpush.bf16.msra.mxu0 %v2241
    %2358 = vmatpush.bf16.msra.mxu0 %v2240
    %2359 = vmatpush.bf16.msra.mxu0 %v2239
    %2360 = vmatpush.bf16.msra.mxu0 %v2238
    %2361 = vmatpush.bf16.msra.mxu0 %v2237
    %2362 = vmatpush.bf16.msra.mxu0 %v2236
    %2363 = vmatpush.bf16.msra.mxu0 %v2235
    %2364 = vmatmul.bf16.gmra.mxu0 %v1905
    %v2365 = vpop.f32.mrf.mxu0
    %v2366 = vadd.f32 %v2353, %v2365
    %v2367 = vpop.f32.mrf.mxu0
    %2368 = vdwg.mxu0
    %2369 = vmatpush.bf16.msra.mxu0 %v2250
    %2370 = vmatpush.bf16.msra.mxu0 %v2249
    %2371 = vmatpush.bf16.msra.mxu0 %v2248
    %2372 = vmatpush.bf16.msra.mxu0 %v2247
    %2373 = vmatpush.bf16.msra.mxu0 %v2246
    %2374 = vmatpush.bf16.msra.mxu0 %v2245
    %2375 = vmatpush.bf16.msra.mxu0 %v2244
    %2376 = vmatpush.bf16.msra.mxu0 %v2243
    %2377 = vmatmul.bf16.gmra.mxu0 %v1906
    %v2378 = vpop.f32.mrf.mxu0
    %v2379 = vadd.f32 %v2366, %v2378
    %v2380 = vpop.f32.mrf.mxu0
    %2381 = vdwg.mxu0
    %2382 = vmatpush.bf16.msra.mxu0 0
    %2383 = vmatpush.bf16.msra.mxu0 0
    %2384 = vmatpush.bf16.msra.mxu0 0
    %2385 = vmatpush.bf16.msra.mxu0 0
    %2386 = vmatpush.bf16.msra.mxu0 0
    %2387 = vmatpush.bf16.msra.mxu0 0
    %2388 = vmatpush.bf16.msra.mxu0 0
    %2389 = vmatpush.bf16.msra.mxu0 %v2251
    %2390 = vmatmul.bf16.gmra.mxu0 %v2302
    %v2391 = vpop.f32.mrf.mxu0
    %v2392 = vadd.f32 %v2379, %v2391
    %v2393 = vpop.f32.mrf.mxu0
    %2394 = vdwg.mxu0
    %v2395 = vadd.f32 %v1847, %v2392
    %v2396 = vstv %s129
    %v2397 = vmul.f32 %v153, %v2396
    %v2398 = vmul.f32 %v154, %v2396
    %v2399 = vmul.f32 %v155, %v2396
    %v2400 = vmul.f32 %v156, %v2396
    %v2401 = vmul.f32 %v157, %v2396
    %v2402 = vmul.f32 %v158, %v2396
    %v2403 = vmul.f32 %v159, %v2396
    %v2404 = vstv %s130
    %v2405 = vmul.f32 %v176, %v2404
    %v2406 = vmul.f32 %v177, %v2404
    %v2407 = vmul.f32 %v178, %v2404
    %v2408 = vmul.f32 %v179, %v2404
    %v2409 = vmul.f32 %v180, %v2404
    %v2410 = vmul.f32 %v181, %v2404
    %v2411 = vmul.f32 %v182, %v2404
    %v2412 = vadd.f32 %v2397, %v2405
    %v2413 = vadd.f32 %v2398, %v2406
    %v2414 = vadd.f32 %v2399, %v2407
    %v2415 = vadd.f32 %v2400, %v2408
    %v2416 = vadd.f32 %v2401, %v2409
    %v2417 = vadd.f32 %v2402, %v2410
    %v2418 = vadd.f32 %v2403, %v2411
    %v2419 = vstv %s131
    %v2420 = vmul.f32 %v199, %v2419
    %v2421 = vmul.f32 %v200, %v2419
    %v2422 = vmul.f32 %v201, %v2419
    %v2423 = vmul.f32 %v202, %v2419
    %v2424 = vmul.f32 %v203, %v2419
    %v2425 = vmul.f32 %v204, %v2419
    %v2426 = vmul.f32 %v205, %v2419
    %v2427 = vadd.f32 %v2412, %v2420
    %v2428 = vadd.f32 %v2413, %v2421
    %v2429 = vadd.f32 %v2414, %v2422
    %v2430 = vadd.f32 %v2415, %v2423
    %v2431 = vadd.f32 %v2416, %v2424
    %v2432 = vadd.f32 %v2417, %v2425
    %v2433 = vadd.f32 %v2418, %v2426
    %v2434 = vstv %s136
    %v2435 = vadd.f32 %v2427, %v2434
    %v2436 = vadd.f32 %v2428, %v2434
    %v2437 = vadd.f32 %v2429, %v2434
    %v2438 = vadd.f32 %v2430, %v2434
    %v2439 = vadd.f32 %v2431, %v2434
    %v2440 = vadd.f32 %v2432, %v2434
    %v2441 = vadd.f32 %v2433, %v2434
    %v2442 = vmax.f32 %v2435, 0.0
    %v2443 = vmax.f32 %v2436, 0.0
    %v2444 = vmax.f32 %v2437, 0.0
    %v2445 = vmax.f32 %v2438, 0.0
    %v2446 = vmax.f32 %v2439, 0.0
    %v2447 = vmax.f32 %v2440, 0.0
    %v2448 = vmax.f32 %v2441, 0.0
    %v2449 = vpack.c.bf16 %v2442, %v2442
    %v2450 = vpack.c.bf16 %v2443, %v2443
    %v2451 = vpack.c.bf16 %v2444, %v2444
    %v2452 = vpack.c.bf16 %v2445, %v2445
    %v2453 = vpack.c.bf16 %v2446, %v2446
    %v2454 = vpack.c.bf16 %v2447, %v2447
    %v2455 = vpack.c.bf16 %v2448, %v2448
    %s2456 = scalar_lea.vmem [#allocation13], 1568
    %v2457 = vld [vmem:[%s2456] sm:$0xf]
    %v2458 = vld [vmem:[%s2456 + $0x4] sm:$0xf]
    %v2459 = vld [vmem:[%s2456 + $0x8] sm:$0xf]
    %v2460 = vld [vmem:[%s2456 + $0xc] sm:$0xf]
    %v2461 = vld [vmem:[%s2456 + $0x10] sm:$0xf]
    %v2462 = vld [vmem:[%s2456 + $0x14] sm:$0xf]
    %v2463 = vld [vmem:[%s2456 + $0x18] sm:$0xf]
    %v2464 = vld [vmem:[%s2456 + $0x1c] sm:$0xf]
    %v2465 = vld [vmem:[%s2456 + $0x20] sm:$0xf]
    %v2466 = vld [vmem:[%s2456 + $0x24] sm:$0xf]
    %v2467 = vld [vmem:[%s2456 + $0x28] sm:$0xf]
    %v2468 = vld [vmem:[%s2456 + $0x2c] sm:$0xf]
    %v2469 = vld [vmem:[%s2456 + $0x30] sm:$0xf]
    %v2470 = vld [vmem:[%s2456 + $0x34] sm:$0xf]
    %v2471 = vld [vmem:[%s2456 + $0x38] sm:$0xf]
    %v2472 = vld [vmem:[%s2456 + $0x3c] sm:$0xf]
    %v2473 = vld [vmem:[%s2456 + $0x40] sm:$0xf]
    %v2474 = vld [vmem:[%s2456 + $0x44] sm:$0xf]
    %v2475 = vld [vmem:[%s2456 + $0x48] sm:$0xf]
    %v2476 = vld [vmem:[%s2456 + $0x4c] sm:$0xf]
    %v2477 = vld [vmem:[%s2456 + $0x50] sm:$0xf]
    %v2478 = vld [vmem:[%s2456 + $0x54] sm:$0xf]
    %v2479 = vld [vmem:[%s2456 + $0x58] sm:$0xf]
    %v2480 = vld [vmem:[%s2456 + $0x5c] sm:$0xf]
    %v2481 = vld [vmem:[%s2456 + $0x60] sm:$0xf]
    %v2482 = vld [vmem:[%s2456 + $0x64] sm:$0xf]
    %v2483 = vld [vmem:[%s2456 + $0x68] sm:$0xf]
    %v2484 = vld [vmem:[%s2456 + $0x6c] sm:$0xf]
    %v2485 = vld [vmem:[%s2456 + $0x70] sm:$0xf]
    %v2486 = vld [vmem:[%s2456 + $0x74] sm:$0xf]
    %v2487 = vld [vmem:[%s2456 + $0x78] sm:$0xf]
    %v2488 = vld [vmem:[%s2456 + $0x7c] sm:$0xf]
    %v2489 = vld [vmem:[%s2456 + $0x80] sm:$0xf]
    %v2490 = vld [vmem:[%s2456 + $0x84] sm:$0xf]
    %v2491 = vld [vmem:[%s2456 + $0x88] sm:$0xf]
    %v2492 = vld [vmem:[%s2456 + $0x8c] sm:$0xf]
    %v2493 = vld [vmem:[%s2456 + $0x90] sm:$0xf]
    %v2494 = vld [vmem:[%s2456 + $0x94] sm:$0xf]
    %v2495 = vld [vmem:[%s2456 + $0x98] sm:$0xf]
    %v2496 = vld [vmem:[%s2456 + $0x9c] sm:$0xf]
    %v2497 = vld [vmem:[%s2456 + $0xa0] sm:$0xf]
    %v2498 = vld [vmem:[%s2456 + $0xa4] sm:$0xf]
    %v2499 = vld [vmem:[%s2456 + $0xa8] sm:$0xf]
    %v2500 = vld [vmem:[%s2456 + $0xac] sm:$0xf]
    %v2501 = vld [vmem:[%s2456 + $0xb0] sm:$0xf]
    %v2502 = vld [vmem:[%s2456 + $0xb4] sm:$0xf]
    %v2503 = vld [vmem:[%s2456 + $0xb8] sm:$0xf]
    %v2504 = vld [vmem:[%s2456 + $0xbc] sm:$0xf]
    %v2505 = vld [vmem:[%s2456 + $0xc0] sm:$0xf]
    %v2506 = vld [vmem:[%s2456 + $0xc4] sm:$0xf]
    %v2507 = vld [vmem:[%s2456 + $0xc8] sm:$0xf]
    %v2508 = vld [vmem:[%s2456 + $0xcc] sm:$0xf]
    %v2509 = vld [vmem:[%s2456 + $0xd0] sm:$0xf]
    %v2510 = vld [vmem:[%s2456 + $0xd4] sm:$0xf]
    %v2511 = vld [vmem:[%s2456 + $0xd8] sm:$0xf]
    %v2512 = vld [vmem:[%s2456 + $0xdc] sm:$0xf]
    %v2513 = vld [vmem:[%s2456 + $0xe0] sm:$0xf]
    %v2514 = vld [vmem:[%s2456 + $0xe4] sm:$0xf]
    %v2515 = vld [vmem:[%s2456 + $0xe8] sm:$0xf]
    %v2516 = vld [vmem:[%s2456 + $0xec] sm:$0xf]
    %v2517 = vld [vmem:[%s2456 + $0xf0] sm:$0xf]
    %v2518 = vld [vmem:[%s2456 + $0xf4] sm:$0xf]
    %v2519 = vld [vmem:[%s2456 + $0xf8] sm:$0xf]
    %v2520 = vld [vmem:[%s2456 + $0xfc] sm:$0xf]
    %v2521 = vld [vmem:[%s2456 + $0x100] sm:$0xf]
    %v2522 = vld [vmem:[%s2456 + $0x104] sm:$0xf]
    %v2523 = vld [vmem:[%s2456 + $0x108] sm:$0xf]
    %v2524 = vld [vmem:[%s2456 + $0x10c] sm:$0xf]
    %v2525 = vld [vmem:[%s2456 + $0x110] sm:$0xf]
    %v2526 = vld [vmem:[%s2456 + $0x114] sm:$0xf]
    %v2527 = vld [vmem:[%s2456 + $0x118] sm:$0xf]
    %v2528 = vld [vmem:[%s2456 + $0x11c] sm:$0xf]
    %v2529 = vld [vmem:[%s2456 + $0x120] sm:$0xf]
    %v2530 = vld [vmem:[%s2456 + $0x124] sm:$0xf]
    %v2531 = vld [vmem:[%s2456 + $0x128] sm:$0xf]
    %v2532 = vld [vmem:[%s2456 + $0x12c] sm:$0xf]
    %v2533 = vld [vmem:[%s2456 + $0x130] sm:$0xf]
    %v2534 = vld [vmem:[%s2456 + $0x134] sm:$0xf]
    %v2535 = vld [vmem:[%s2456 + $0x138] sm:$0xf]
    %v2536 = vld [vmem:[%s2456 + $0x13c] sm:$0xf]
    %v2537 = vld [vmem:[%s2456 + $0x140] sm:$0xf]
    %v2538 = vld [vmem:[%s2456 + $0x144] sm:$0xf]
    %v2539 = vld [vmem:[%s2456 + $0x148] sm:$0xf]
    %v2540 = vld [vmem:[%s2456 + $0x14c] sm:$0xf]
    %v2541 = vld [vmem:[%s2456 + $0x150] sm:$0xf]
    %v2542 = vld [vmem:[%s2456 + $0x154] sm:$0xf]
    %v2543 = vld [vmem:[%s2456 + $0x158] sm:$0xf]
    %v2544 = vld [vmem:[%s2456 + $0x15c] sm:$0xf]
    %v2545 = vld [vmem:[%s2456 + $0x160] sm:$0xf]
    %v2546 = vld [vmem:[%s2456 + $0x164] sm:$0xf]
    %v2547 = vld [vmem:[%s2456 + $0x168] sm:$0xf]
    %v2548 = vld [vmem:[%s2456 + $0x16c] sm:$0xf]
    %v2549 = vld [vmem:[%s2456 + $0x170] sm:$0xf]
    %v2550 = vld [vmem:[%s2456 + $0x174] sm:$0xf]
    %v2551 = vld [vmem:[%s2456 + $0x178] sm:$0xf]
    %v2552 = vld [vmem:[%s2456 + $0x17c] sm:$0xf]
    %v2553 = vld [vmem:[%s2456 + $0x180] sm:$0xf]
    %v2554 = vld [vmem:[%s2456 + $0x184] sm:$0xf]
    %v2653 = vunpack.c.l.b16 %v2457
    %v2654 = vunpack.c.l.b16 %v2458
    %v2655 = vunpack.c.l.b16 %v2459
    %v2656 = vunpack.c.l.b16 %v2460
    %v2657 = vunpack.c.l.b16 %v2461
    %v2658 = vunpack.c.l.b16 %v2462
    %v2659 = vunpack.c.l.b16 %v2463
    %v2660 = vunpack.c.l.b16 %v2464
    %v2661 = vunpack.c.l.b16 %v2465
    %v2662 = vunpack.c.l.b16 %v2466
    %v2663 = vunpack.c.l.b16 %v2467
    %v2664 = vunpack.c.l.b16 %v2468
    %v2665 = vunpack.c.l.b16 %v2469
    %v2666 = vunpack.c.l.b16 %v2470
    %v2667 = vunpack.c.l.b16 %v2471
    %v2668 = vunpack.c.l.b16 %v2472
    %v2669 = vunpack.c.l.b16 %v2473
    %v2670 = vunpack.c.l.b16 %v2474
    %v2671 = vunpack.c.l.b16 %v2475
    %v2672 = vunpack.c.l.b16 %v2476
    %v2673 = vunpack.c.l.b16 %v2477
    %v2674 = vunpack.c.l.b16 %v2478
    %v2675 = vunpack.c.l.b16 %v2479
    %v2676 = vunpack.c.l.b16 %v2480
    %v2677 = vunpack.c.l.b16 %v2481
    %v2678 = vunpack.c.l.b16 %v2482
    %v2679 = vunpack.c.l.b16 %v2483
    %v2680 = vunpack.c.l.b16 %v2484
    %v2681 = vunpack.c.l.b16 %v2485
    %v2682 = vunpack.c.l.b16 %v2486
    %v2683 = vunpack.c.l.b16 %v2487
    %v2684 = vunpack.c.l.b16 %v2488
    %v2685 = vunpack.c.l.b16 %v2489
    %v2686 = vunpack.c.l.b16 %v2490
    %v2687 = vunpack.c.l.b16 %v2491
    %v2688 = vunpack.c.l.b16 %v2492
    %v2689 = vunpack.c.l.b16 %v2493
    %v2690 = vunpack.c.l.b16 %v2494
    %v2691 = vunpack.c.l.b16 %v2495
    %v2692 = vunpack.c.l.b16 %v2496
    %v2693 = vunpack.c.l.b16 %v2497
    %v2694 = vunpack.c.l.b16 %v2498
    %v2695 = vunpack.c.l.b16 %v2499
    %v2696 = vunpack.c.l.b16 %v2500
    %v2697 = vunpack.c.l.b16 %v2501
    %v2698 = vunpack.c.l.b16 %v2502
    %v2699 = vunpack.c.l.b16 %v2503
    %v2700 = vunpack.c.l.b16 %v2504
    %v2701 = vunpack.c.l.b16 %v2505
    %v2702 = vunpack.c.l.b16 %v2506
    %v2703 = vunpack.c.l.b16 %v2507
    %v2704 = vunpack.c.l.b16 %v2508
    %v2705 = vunpack.c.l.b16 %v2509
    %v2706 = vunpack.c.l.b16 %v2510
    %v2707 = vunpack.c.l.b16 %v2511
    %v2708 = vunpack.c.l.b16 %v2512
    %v2709 = vunpack.c.l.b16 %v2513
    %v2710 = vunpack.c.l.b16 %v2514
    %v2711 = vunpack.c.l.b16 %v2515
    %v2712 = vunpack.c.l.b16 %v2516
    %v2713 = vunpack.c.l.b16 %v2517
    %v2714 = vunpack.c.l.b16 %v2518
    %v2715 = vunpack.c.l.b16 %v2519
    %v2716 = vunpack.c.l.b16 %v2520
    %v2717 = vunpack.c.l.b16 %v2521
    %v2718 = vunpack.c.l.b16 %v2522
    %v2719 = vunpack.c.l.b16 %v2523
    %v2720 = vunpack.c.l.b16 %v2524
    %v2721 = vunpack.c.l.b16 %v2525
    %v2722 = vunpack.c.l.b16 %v2526
    %v2723 = vunpack.c.l.b16 %v2527
    %v2724 = vunpack.c.l.b16 %v2528
    %v2725 = vunpack.c.l.b16 %v2529
    %v2726 = vunpack.c.l.b16 %v2530
    %v2727 = vunpack.c.l.b16 %v2531
    %v2728 = vunpack.c.l.b16 %v2532
    %v2729 = vunpack.c.l.b16 %v2533
    %v2730 = vunpack.c.l.b16 %v2534
    %v2731 = vunpack.c.l.b16 %v2535
    %v2732 = vunpack.c.l.b16 %v2536
    %v2733 = vunpack.c.l.b16 %v2537
    %v2734 = vunpack.c.l.b16 %v2538
    %v2735 = vunpack.c.l.b16 %v2539
    %v2736 = vunpack.c.l.b16 %v2540
    %v2737 = vunpack.c.l.b16 %v2541
    %v2738 = vunpack.c.l.b16 %v2542
    %v2739 = vunpack.c.l.b16 %v2543
    %v2740 = vunpack.c.l.b16 %v2544
    %v2741 = vunpack.c.l.b16 %v2545
    %v2742 = vunpack.c.l.b16 %v2546
    %v2743 = vunpack.c.l.b16 %v2547
    %v2744 = vunpack.c.l.b16 %v2548
    %v2745 = vunpack.c.l.b16 %v2549
    %v2746 = vunpack.c.l.b16 %v2550
    %v2747 = vunpack.c.l.b16 %v2551
    %v2748 = vunpack.c.l.b16 %v2552
    %v2749 = vunpack.c.l.b16 %v2553
    %v2750 = vunpack.c.l.b16 %v2554
    %v2751 = vpack.c.b16 %v2654, %v2653
    %v2752 = vpack.c.b16 %v2656, %v2655
    %v2753 = vpack.c.b16 %v2658, %v2657
    %v2754 = vpack.c.b16 %v2660, %v2659
    %v2755 = vpack.c.b16 %v2662, %v2661
    %v2756 = vpack.c.b16 %v2664, %v2663
    %v2757 = vpack.c.b16 %v2666, %v2665
    %v2758 = vpack.c.b16 %v2668, %v2667
    %v2759 = vpack.c.b16 %v2670, %v2669
    %v2760 = vpack.c.b16 %v2672, %v2671
    %v2761 = vpack.c.b16 %v2674, %v2673
    %v2762 = vpack.c.b16 %v2676, %v2675
    %v2763 = vpack.c.b16 %v2678, %v2677
    %v2764 = vpack.c.b16 %v2680, %v2679
    %v2765 = vpack.c.b16 %v2682, %v2681
    %v2766 = vpack.c.b16 %v2684, %v2683
    %v2767 = vpack.c.b16 %v2686, %v2685
    %v2768 = vpack.c.b16 %v2688, %v2687
    %v2769 = vpack.c.b16 %v2690, %v2689
    %v2770 = vpack.c.b16 %v2692, %v2691
    %v2771 = vpack.c.b16 %v2694, %v2693
    %v2772 = vpack.c.b16 %v2696, %v2695
    %v2773 = vpack.c.b16 %v2698, %v2697
    %v2774 = vpack.c.b16 %v2700, %v2699
    %v2775 = vpack.c.b16 %v2702, %v2701
    %v2776 = vpack.c.b16 %v2704, %v2703
    %v2777 = vpack.c.b16 %v2706, %v2705
    %v2778 = vpack.c.b16 %v2708, %v2707
    %v2779 = vpack.c.b16 %v2710, %v2709
    %v2780 = vpack.c.b16 %v2712, %v2711
    %v2781 = vpack.c.b16 %v2714, %v2713
    %v2782 = vpack.c.b16 %v2716, %v2715
    %v2783 = vpack.c.b16 %v2718, %v2717
    %v2784 = vpack.c.b16 %v2720, %v2719
    %v2785 = vpack.c.b16 %v2722, %v2721
    %v2786 = vpack.c.b16 %v2724, %v2723
    %v2787 = vpack.c.b16 %v2726, %v2725
    %v2788 = vpack.c.b16 %v2728, %v2727
    %v2789 = vpack.c.b16 %v2730, %v2729
    %v2790 = vpack.c.b16 %v2732, %v2731
    %v2791 = vpack.c.b16 %v2734, %v2733
    %v2792 = vpack.c.b16 %v2736, %v2735
    %v2793 = vpack.c.b16 %v2738, %v2737
    %v2794 = vpack.c.b16 %v2740, %v2739
    %v2795 = vpack.c.b16 %v2742, %v2741
    %v2796 = vpack.c.b16 %v2744, %v2743
    %v2797 = vpack.c.b16 %v2746, %v2745
    %v2798 = vpack.c.b16 %v2748, %v2747
    %v2799 = vpack.c.b16 %v2750, %v2749
    %v2850 = vsel %vm817, %v2455, 0
    %2852 = vmatpush.bf16.msra.mxu0 %v2758
    %2853 = vmatpush.bf16.msra.mxu0 %v2757
    %2854 = vmatpush.bf16.msra.mxu0 %v2756
    %2855 = vmatpush.bf16.msra.mxu0 %v2755
    %2856 = vmatpush.bf16.msra.mxu0 %v2754
    %2857 = vmatpush.bf16.msra.mxu0 %v2753
    %2858 = vmatpush.bf16.msra.mxu0 %v2752
    %2859 = vmatpush.bf16.msra.mxu0 %v2751
    %2860 = vmatmul.bf16.gmra.mxu0 %v2449
    %v2861 = vpop.f32.mrf.mxu0
    %v2862 = vadd.f32 0.0, %v2861
    %v2863 = vpop.f32.mrf.mxu0
    %2864 = vdwg.mxu0
    %2865 = vmatpush.bf16.msra.mxu0 %v2766
    %2866 = vmatpush.bf16.msra.mxu0 %v2765
    %2867 = vmatpush.bf16.msra.mxu0 %v2764
    %2868 = vmatpush.bf16.msra.mxu0 %v2763
    %2869 = vmatpush.bf16.msra.mxu0 %v2762
    %2870 = vmatpush.bf16.msra.mxu0 %v2761
    %2871 = vmatpush.bf16.msra.mxu0 %v2760
    %2872 = vmatpush.bf16.msra.mxu0 %v2759
    %2873 = vmatmul.bf16.gmra.mxu0 %v2450
    %v2874 = vpop.f32.mrf.mxu0
    %v2875 = vadd.f32 %v2862, %v2874
    %v2876 = vpop.f32.mrf.mxu0
    %2877 = vdwg.mxu0
    %2878 = vmatpush.bf16.msra.mxu0 %v2774
    %2879 = vmatpush.bf16.msra.mxu0 %v2773
    %2880 = vmatpush.bf16.msra.mxu0 %v2772
    %2881 = vmatpush.bf16.msra.mxu0 %v2771
    %2882 = vmatpush.bf16.msra.mxu0 %v2770
    %2883 = vmatpush.bf16.msra.mxu0 %v2769
    %2884 = vmatpush.bf16.msra.mxu0 %v2768
    %2885 = vmatpush.bf16.msra.mxu0 %v2767
    %2886 = vmatmul.bf16.gmra.mxu0 %v2451
    %v2887 = vpop.f32.mrf.mxu0
    %v2888 = vadd.f32 %v2875, %v2887
    %v2889 = vpop.f32.mrf.mxu0
    %2890 = vdwg.mxu0
    %2891 = vmatpush.bf16.msra.mxu0 %v2782
    %2892 = vmatpush.bf16.msra.mxu0 %v2781
    %2893 = vmatpush.bf16.msra.mxu0 %v2780
    %2894 = vmatpush.bf16.msra.mxu0 %v2779
    %2895 = vmatpush.bf16.msra.mxu0 %v2778
    %2896 = vmatpush.bf16.msra.mxu0 %v2777
    %2897 = vmatpush.bf16.msra.mxu0 %v2776
    %2898 = vmatpush.bf16.msra.mxu0 %v2775
    %2899 = vmatmul.bf16.gmra.mxu0 %v2452
    %v2900 = vpop.f32.mrf.mxu0
    %v2901 = vadd.f32 %v2888, %v2900
    %v2902 = vpop.f32.mrf.mxu0
    %2903 = vdwg.mxu0
    %2904 = vmatpush.bf16.msra.mxu0 %v2790
    %2905 = vmatpush.bf16.msra.mxu0 %v2789
    %2906 = vmatpush.bf16.msra.mxu0 %v2788
    %2907 = vmatpush.bf16.msra.mxu0 %v2787
    %2908 = vmatpush.bf16.msra.mxu0 %v2786
    %2909 = vmatpush.bf16.msra.mxu0 %v2785
    %2910 = vmatpush.bf16.msra.mxu0 %v2784
    %2911 = vmatpush.bf16.msra.mxu0 %v2783
    %2912 = vmatmul.bf16.gmra.mxu0 %v2453
    %v2913 = vpop.f32.mrf.mxu0
    %v2914 = vadd.f32 %v2901, %v2913
    %v2915 = vpop.f32.mrf.mxu0
    %2916 = vdwg.mxu0
    %2917 = vmatpush.bf16.msra.mxu0 %v2798
    %2918 = vmatpush.bf16.msra.mxu0 %v2797
    %2919 = vmatpush.bf16.msra.mxu0 %v2796
    %2920 = vmatpush.bf16.msra.mxu0 %v2795
    %2921 = vmatpush.bf16.msra.mxu0 %v2794
    %2922 = vmatpush.bf16.msra.mxu0 %v2793
    %2923 = vmatpush.bf16.msra.mxu0 %v2792
    %2924 = vmatpush.bf16.msra.mxu0 %v2791
    %2925 = vmatmul.bf16.gmra.mxu0 %v2454
    %v2926 = vpop.f32.mrf.mxu0
    %v2927 = vadd.f32 %v2914, %v2926
    %v2928 = vpop.f32.mrf.mxu0
    %2929 = vdwg.mxu0
    %2930 = vmatpush.bf16.msra.mxu0 0
    %2931 = vmatpush.bf16.msra.mxu0 0
    %2932 = vmatpush.bf16.msra.mxu0 0
    %2933 = vmatpush.bf16.msra.mxu0 0
    %2934 = vmatpush.bf16.msra.mxu0 0
    %2935 = vmatpush.bf16.msra.mxu0 0
    %2936 = vmatpush.bf16.msra.mxu0 0
    %2937 = vmatpush.bf16.msra.mxu0 %v2799
    %2938 = vmatmul.bf16.gmra.mxu0 %v2850
    %v2939 = vpop.f32.mrf.mxu0
    %v2940 = vadd.f32 %v2927, %v2939
    %v2941 = vpop.f32.mrf.mxu0
    %2942 = vdwg.mxu0
    %v2943 = vadd.f32 %v2395, %v2940
    %v2944 = vmax.f32 %v2943, 0.0
    %2945 = vst [vmem:[#allocation15] sm:$0xff] %v2944
    // Predicated region
    $region50: #{tpu_custom_call.1} parent=1 // pred_check
      _
    $region51: #{tpu_custom_call.1} parent=1 // pred_check_branch
      %2947 = sbr.rel (0) target = $region53
    $region52: #{tpu_custom_call.1} parent=1 // pred_region
      %2949 = vsyncadd [#allocation4], 0
      %s2951 = sshll.u32 [#allocation15], 4
      %s2952 = int_to_ptr.vmem [resolvable:$true] %s2951
      %s2953 = sshll.u32 %s6, 4
      %s2954 = int_to_ptr.hbm [resolvable:$true] %s2953
      %2956 = dma.vmem_to_hbm [thread:$0]  %s2952, 128, %s2954, [#allocation4]
    $region53: #{tpu_custom_call.1} parent=1 // pred_fallthru
      _
    // Predicated region
    $region54: #{tpu_custom_call.1} parent=1 // pred_check
      _
    $region55: #{tpu_custom_call.1} parent=1 // pred_check_branch
      %2958 = sbr.rel (0) target = $region57
    $region56: #{tpu_custom_call.1} parent=1 // pred_region
      %2960 = dma.done [#allocation4], 128
    $region57: #{tpu_custom_call.1} parent=1 // pred_fallthru
      _
    %2961 = vsyncpa [#allocation3], 1
    %2962 = vsyncpa [#allocation14], 1
    %2963 = vsyncpa [#allocation4], 1
    %2964 = vsyncpa [#allocation5], 1
    %2965 = vsyncpa [#allocation8], 1
    %2966 = vsyncpa [#allocation6], 1
    %2967 = vsyncpa [#allocation11], 1

</llo_original>
